<compile_context>
chip_gen: v6e
topology: v6e:2x2x1
jax: 0.10.0
libtpu: 0.0.40
codegen_flags: <defaults>
</compile_context>

<pallas_src>
import functools
import math

import jax
import jax.numpy as jnp
from jax.experimental import pallas as pl
from jax.experimental.pallas import tpu as pltpu

LN_EPS = 1e-12
NEG_INF = float(jnp.finfo(jnp.float32).min)

_TM_CAND = (512, 256, 128, 64, 32, 16, 8)   # row (token) tiles: multiples of 8
_TN_CAND = (1024, 512, 256, 128)            # feature / vocab tiles: multiples of 128


@functools.lru_cache(maxsize=None)
def _get_vmem_limit():
    """~3/4 of per-core VMEM: ~48 MiB on v7x (64 MiB/TC), ~96 MiB on v5e/v6e (128 MiB)."""
    cap = None
    try:
        info = pltpu.get_tpu_info()
        cap = getattr(info, "vmem_capacity_bytes", None)
    except Exception:
        cap = None
    if not cap:
        cap = 64 * 1024 * 1024   # conservative fallback = v7x per-TC VMEM
    return int(max(32 * 1024 * 1024, min(cap * 3 // 4, 112 * 1024 * 1024)))


def _cparams(semantics):
    return pltpu.CompilerParams(dimension_semantics=semantics,
                                vmem_limit_bytes=_get_vmem_limit())


def _pick_tile(dim, candidates):
    """Largest candidate that evenly divides dim; fall back to the full dim."""
    for c in candidates:
        if dim >= c and dim % c == 0:
            return c
    return dim


def _gelu_new(x):
    # HF "gelu_new": 0.5*x*(1+tanh(sqrt(2/pi)*(x+0.044715*x^3)))  (f32 math)
    return 0.5 * x * (1.0 + jnp.tanh(math.sqrt(2.0 / math.pi) * (x + 0.044715 * x * x * x)))


# ----------------------------- Pallas kernels ----------------------------- #

def _embed_ln_kernel(word_ref, pos_ref, tok_ref, g_ref, b_ref, o_ref):
    hsum = (word_ref[...].astype(jnp.float32) + pos_ref[...].astype(jnp.float32)
            + tok_ref[...].astype(jnp.float32))                       # [ts,H] f32
    mean = jnp.mean(hsum, axis=-1, keepdims=True)
    var = jnp.mean((hsum - mean) ** 2, axis=-1, keepdims=True)
    y = (hsum - mean) * jax.lax.rsqrt(var + LN_EPS) * g_ref[...] + b_ref[...]
    o_ref[...] = y.astype(o_ref.dtype)


def pallas_embed_layernorm(word, pos, tok, gamma, beta):
    b, s, h = word.shape
    ts = _pick_tile(s, _TM_CAND)
    return pl.pallas_call(
        _embed_ln_kernel,
        out_shape=jax.ShapeDtypeStruct((b, s, h), jnp.bfloat16),
        grid=(b, s // ts),                                 # finer grid -> pipelining / 2-TC split
        in_specs=[
            pl.BlockSpec((None, ts, h), lambda i, j: (i, j, 0)),
            pl.BlockSpec((ts, h), lambda i, j: (j, 0)),    # pos block reused across batches
            pl.BlockSpec((1, h), lambda i, j: (0, 0)),
            pl.BlockSpec((1, h), lambda i, j: (0, 0)),
            pl.BlockSpec((1, h), lambda i, j: (0, 0)),
        ],
        out_specs=pl.BlockSpec((None, ts, h), lambda i, j: (i, j, 0)),
        compiler_params=_cparams(("parallel", "parallel")),
    )(word, pos, tok, gamma, beta)


def _dense_kernel(x_ref, w_ref, b_ref, o_ref, *, activation):
    acc = jnp.dot(x_ref[...], w_ref[...], preferred_element_type=jnp.float32)
    acc = acc + b_ref[...]
    if activation == "gelu_new":
        acc = _gelu_new(acc)
    o_ref[...] = acc.astype(o_ref.dtype)


def pallas_dense(x, w, bias, activation=None):
    """x:[M,K] bf16 @ w:[K,N] bf16 + bias (optional GELU epilogue), f32 acc, bf16 out.

    Weight gets a constant index_map -> fetched from HBM once and kept VMEM-resident
    while the grid streams M row tiles (BERT-sized K,N fit comfortably: <=4.5 MiB bf16).
    """
    m, k = x.shape
    n = w.shape[1]
    tm = _pick_tile(m, _TM_CAND)
    kern = functools.partial(_dense_kernel, activation=activation)
    return pl.pallas_call(
        kern,
        out_shape=jax.ShapeDtypeStruct((m, n), jnp.bfloat16),
        grid=(m // tm,),
        in_specs=[
            pl.BlockSpec((tm, k), lambda i: (i, 0)),
            pl.BlockSpec((k, n), lambda i: (0, 0)),     # weight resident across M tiles
            pl.BlockSpec((1, n), lambda i: (0, 0)),
        ],
        out_specs=pl.BlockSpec((tm, n), lambda i: (i, 0)),
        compiler_params=_cparams(("parallel",)),
    )(x, w, bias)


def _dense_res_ln_kernel(x_ref, w_ref, b_ref, res_ref, g_ref, bet_ref, o_ref):
    acc = jnp.dot(x_ref[...], w_ref[...], preferred_element_type=jnp.float32)
    hsum = acc + b_ref[...] + res_ref[...].astype(jnp.float32)
    mean = jnp.mean(hsum, axis=-1, keepdims=True)
    var = jnp.mean((hsum - mean) ** 2, axis=-1, keepdims=True)
    y = (hsum - mean) * jax.lax.rsqrt(var + LN_EPS) * g_ref[...] + bet_ref[...]
    o_ref[...] = y.astype(o_ref.dtype)


def pallas_dense_residual_ln(x, w, bias, residual, gamma, beta):
    """(x @ w + bias + residual) -> LayerNorm, fused.  N kept whole (for the LN) and the
    weight stays VMEM-resident across the M row tiles."""
    m, k = x.shape
    n = w.shape[1]
    tm = _pick_tile(m, _TM_CAND)
    return pl.pallas_call(
        _dense_res_ln_kernel,
        out_shape=jax.ShapeDtypeStruct((m, n), jnp.bfloat16),
        grid=(m // tm,),
        in_specs=[
            pl.BlockSpec((tm, k), lambda i: (i, 0)),
            pl.BlockSpec((k, n), lambda i: (0, 0)),     # weight resident
            pl.BlockSpec((1, n), lambda i: (0, 0)),
            pl.BlockSpec((tm, n), lambda i: (i, 0)),
            pl.BlockSpec((1, n), lambda i: (0, 0)),
            pl.BlockSpec((1, n), lambda i: (0, 0)),
        ],
        out_specs=pl.BlockSpec((tm, n), lambda i: (i, 0)),
        compiler_params=_cparams(("parallel",)),
    )(x, w, bias, residual, gamma, beta)


def _attention_kernel(qkv_ref, mask_ref, o_ref, *, n_heads, d_head, hidden, scale):
    # qkv_ref: [S, 3H] bf16 for one batch row; mask_ref: [1, S] f32; o_ref: [S, H] bf16
    add_mask = (1.0 - mask_ref[...]) * NEG_INF            # [1,S], broadcast over queries
    # Static head loop: every lane slice is static (Mosaic dislikes dynamic minor-dim
    # slicing); per-head stores into o_ref bound ctx liveness and avoid the n_heads-way
    # lane concatenate of the previous version.
    # TODO(synk): for d_head=64 on v6e/v7x, process head pairs with 128-wide lane slices
    # (batched dot over the pair) to fully feed the 256-wide MXU.
    # TODO(synk): for long sequences an online-softmax (flash) q/k tiling would bound the
    # S^2 score tile; full-row softmax per batch is fine at these sizes.
    for hd in range(n_heads):
        q0 = hd * d_head
        qh = qkv_ref[:, q0:q0 + d_head] * scale           # scale Q: S*d_head muls, not S^2
        kh = qkv_ref[:, hidden + q0: hidden + q0 + d_head]
        vh = qkv_ref[:, 2 * hidden + q0: 2 * hidden + q0 + d_head]
        scores = jax.lax.dot_general(qh, kh, (((1,), (1,)), ((), ())),
                                     preferred_element_type=jnp.float32)
        scores = scores + add_mask
        mmax = jnp.max(scores, axis=-1, keepdims=True)
        p = jnp.exp(scores - mmax)
        inv = pl.reciprocal(jnp.sum(p, axis=-1, keepdims=True), approx=True)
        ctx = jnp.dot(p.astype(vh.dtype), vh, preferred_element_type=jnp.float32) * inv
        o_ref[:, q0:q0 + d_head] = ctx.astype(o_ref.dtype)   # merge heads in place


def pallas_attention(qkv, mask3, n_heads, d_head, hidden):
    b, s, _ = qkv.shape
    kern = functools.partial(_attention_kernel, n_heads=n_heads, d_head=d_head,
                             hidden=hidden, scale=1.0 / math.sqrt(d_head))
    return pl.pallas_call(
        kern,
        out_shape=jax.ShapeDtypeStruct((b, s, hidden), jnp.bfloat16),
        grid=(b,),                                        # >=2 parallel steps whenever B>=2
        in_specs=[
            pl.BlockSpec((None, s, 3 * hidden), lambda i: (i, 0, 0)),
            pl.BlockSpec((None, 1, s), lambda i: (i, 0, 0)),
        ],
        out_specs=pl.BlockSpec((None, s, hidden), lambda i: (i, 0, 0)),
        compiler_params=_cparams(("parallel",)),
    )(qkv, mask3)


def _head_kernel(x_ref, e_ref, o_ref):
    # logits tile = x @ E^T, contracted over hidden dim (no transposed table in HBM)
    o_ref[...] = jax.lax.dot_general(x_ref[...], e_ref[...], (((1,), (1,)), ((), ())),
                                     preferred_element_type=jnp.float32)


def pallas_lm_head(x, embed_pad, v):
    """Tied-weight LM head.  embed_pad is the bf16 table pre-padded to a 128 multiple.

    Either keep x fully VMEM-resident (grid over vocab tiles only), or put the vocab axis
    outermost so each table block stays resident across the inner M sweep -- in both
    cases the big V x H table streams from HBM exactly once.
    """
    m, h = x.shape
    v_pad = embed_pad.shape[0]
    tn = _pick_tile(v_pad, _TN_CAND)
    vmem_limit = _get_vmem_limit()
    resident_bytes = m * h * 2 + 2 * tn * h * 2 + 2 * m * tn * 4
    if resident_bytes <= vmem_limit // 2:
        logits = pl.pallas_call(
            _head_kernel,
            out_shape=jax.ShapeDtypeStruct((m, v_pad), jnp.float32),
            grid=(v_pad // tn,),
            in_specs=[
                pl.BlockSpec((m, h), lambda j: (0, 0)),        # x resident
                pl.BlockSpec((tn, h), lambda j: (j, 0)),       # table streamed once
            ],
            out_specs=pl.BlockSpec((m, tn), lambda j: (0, j)),
            compiler_params=_cparams(("parallel",)),
        )(x, embed_pad)
    else:
        tm = _pick_tile(m, _TM_CAND)
        logits = pl.pallas_call(
            _head_kernel,
            out_shape=jax.ShapeDtypeStruct((m, v_pad), jnp.float32),
            grid=(v_pad // tn, m // tm),                       # vocab outermost -> table block
            in_specs=[                                         # resident across inner M sweep
                pl.BlockSpec((tm, h), lambda j, i: (i, 0)),
                pl.BlockSpec((tn, h), lambda j, i: (j, 0)),
            ],
            out_specs=pl.BlockSpec((tm, tn), lambda j, i: (i, j)),
            compiler_params=_cparams(("parallel", "parallel")),
        )(x, embed_pad)
    if v_pad != v:
        # TODO(synk): downstream could consume padded logits directly to skip this O(M*V) copy.
        logits = logits[:, :v]
    return logits


# ----------------------------- model wrapper ----------------------------- #

def init_params(key, vocab_size, config, init_std=0.02, padding_idx=0):
    """All matmul weights / embeddings stored bf16 ONCE; biases & LN params stay f32."""
    h = config["hidden_size"]
    inter = config["intermediate_size"]
    max_pos = config["max_position_embeddings"]
    n_layers = config["num_hidden_layers"]

    keys = iter(jax.random.split(key, 8 + 6 * n_layers))

    def normal(k, shape):
        return init_std * jax.random.normal(k, shape, dtype=jnp.float32)

    v_pad = ((vocab_size + 127) // 128) * 128
    embed = normal(next(keys), (vocab_size, h))
    embed = embed.at[padding_idx].set(0.0)          # padding_idx row zeroed (as in __init__)
    embed_pad = jnp.pad(embed, ((0, v_pad - vocab_size), (0, 0))).astype(jnp.bfloat16)

    params = {
        "embed": embed_pad,                                          # bf16 [v_pad, H]
        "pos_emb": normal(next(keys), (max_pos, h)).astype(jnp.bfloat16),
        "tok_emb": normal(next(keys), (2, h)).astype(jnp.bfloat16),
        "emb_ln_g": jnp.ones((1, h), jnp.float32),
        "emb_ln_b": jnp.zeros((1, h), jnp.float32),
        "layers": [],
    }
    for _ in range(n_layers):
        qkv_w = jnp.concatenate([normal(next(keys), (h, h)) for _ in range(3)], axis=1)
        layer = {
            "qkv_w": qkv_w.astype(jnp.bfloat16), "qkv_b": jnp.zeros((1, 3 * h), jnp.float32),
            "ao_w": normal(next(keys), (h, h)).astype(jnp.bfloat16),
            "ao_b": jnp.zeros((1, h), jnp.float32),
            "ao_ln_g": jnp.ones((1, h), jnp.float32), "ao_ln_b": jnp.zeros((1, h), jnp.float32),
            "i_w": normal(next(keys), (h, inter)).astype(jnp.bfloat16),
            "i_b": jnp.zeros((1, inter), jnp.float32),
            "o_w": normal(next(keys), (inter, h)).astype(jnp.bfloat16),
            "o_b": jnp.zeros((1, h), jnp.float32),
            "o_ln_g": jnp.ones((1, h), jnp.float32), "o_ln_b": jnp.zeros((1, h), jnp.float32),
        }
        params["layers"].append(layer)
    return params


def bert4rec_forward(params, input_ids, attention_mask, config, add_head=True, vocab_size=None):
    b, s = input_ids.shape
    h = config["hidden_size"]
    n_heads = config["num_attention_heads"]
    d_head = h // n_heads
    if vocab_size is None:
        vocab_size = config["vocab_size"]

    # --- embeddings ---
    # TODO(synk): embedding-table gather (jnp.take) kept in plain JAX; no clean tiny-Pallas gather.
    word = jnp.take(params["embed"], input_ids.reshape(-1), axis=0).reshape(b, s, h)  # bf16
    pos = params["pos_emb"][:s]                                  # [S,H] bf16
    x = pallas_embed_layernorm(word, pos, params["tok_emb"][:1],
                               params["emb_ln_g"], params["emb_ln_b"])   # [B,S,H] bf16
    x = x.reshape(b * s, h)

    mask3 = attention_mask.astype(jnp.float32).reshape(b, 1, s)  # additive mask built in-kernel

    # --- encoder layers (4 fused pallas_calls per layer) ---
    for layer in params["layers"]:
        qkv = pallas_dense(x, layer["qkv_w"], layer["qkv_b"])                        # [M,3H]
        ctx = pallas_attention(qkv.reshape(b, s, 3 * h), mask3, n_heads, d_head, h)  # [B,S,H]
        x = pallas_dense_residual_ln(ctx.reshape(b * s, h), layer["ao_w"], layer["ao_b"],
                                     x, layer["ao_ln_g"], layer["ao_ln_b"])
        inter = pallas_dense(x, layer["i_w"], layer["i_b"], activation="gelu_new")
        x = pallas_dense_residual_ln(inter, layer["o_w"], layer["o_b"],
                                     x, layer["o_ln_g"], layer["o_ln_b"])

    if add_head:
        logits = pallas_lm_head(x, params["embed"], vocab_size)     # tied weights, no bias
        return logits.reshape(b, s, vocab_size)
    return x.astype(jnp.float32).reshape(b, s, h)


# --------------------------------- main ---------------------------------- #

if __name__ == "__main__":
    VOCAB = 50
    BERT_CONFIG = dict(
        vocab_size=VOCAB,
        hidden_size=32,
        num_hidden_layers=2,
        num_attention_heads=2,
        intermediate_size=64,
        max_position_embeddings=16,
        hidden_act="gelu_new",
        layer_norm_eps=1e-12,
    )
    B, S = 2, 8

    root = jax.random.PRNGKey(0)
    k_param, k_ids = jax.random.split(root)

    params = init_params(k_param, VOCAB, BERT_CONFIG, init_std=0.02, padding_idx=0)

    attention_mask = jnp.array(
        [[1, 1, 1, 1, 1, 1, 1, 1],
         [1, 1, 1, 1, 1, 0, 0, 0]], dtype=jnp.int32)
    input_ids = jax.random.randint(k_ids, (B, S), 1, VOCAB, dtype=jnp.int32)
    input_ids = jnp.where(attention_mask == 1, input_ids, 0)   # padded positions -> padding_idx

    fwd = jax.jit(functools.partial(bert4rec_forward, config=BERT_CONFIG,
                                    add_head=True, vocab_size=VOCAB))
    logits = fwd(params, input_ids, attention_mask)
    logits = jax.block_until_ready(logits)

    assert logits.shape == (B, S, VOCAB), logits.shape
    assert bool(jnp.all(jnp.isfinite(logits.astype(jnp.float32))))
    print("KERNEL_OK")
</pallas_src>

<mosaic_0001>
module attributes {stable_mosaic.version = 11 : i64} {
  func.func @_embed_ln_kernel(%arg0: i32, %arg1: i32, %arg2: memref<1x8x32xbf16, #tpu.memory_space<vmem>>, %arg3: memref<8x32xbf16, #tpu.memory_space<vmem>>, %arg4: memref<1x32xbf16, #tpu.memory_space<vmem>>, %arg5: memref<1x32xf32, #tpu.memory_space<vmem>>, %arg6: memref<1x32xf32, #tpu.memory_space<vmem>>, %arg7: memref<1x8x32xbf16, #tpu.memory_space<vmem>>) attributes {dimension_semantics = [#tpu.dimension_semantics<parallel>, #tpu.dimension_semantics<parallel>], iteration_bounds = array<i64: 2, 1>, scalar_prefetch = 0 : i64, scratch_operands = 0 : i64, tpu.core_type = #tpu.core_type<tc>, window_params = [{transform_indices = @transform_0, window_bounds = array<i64: 1, 8, 32>}, {transform_indices = @transform_1, window_bounds = array<i64: 8, 32>}, {pipeline_mode = #tpu.pipeline_mode<synchronous>, transform_indices = @transform_2, window_bounds = array<i64: 1, 32>}, {pipeline_mode = #tpu.pipeline_mode<synchronous>, transform_indices = @transform_3, window_bounds = array<i64: 1, 32>}, {pipeline_mode = #tpu.pipeline_mode<synchronous>, transform_indices = @transform_4, window_bounds = array<i64: 1, 32>}, {transform_indices = @transform_5, window_bounds = array<i64: 1, 8, 32>}]} {
    %c0 = arith.constant 0 : index
    %c0_0 = arith.constant 0 : index
    %c0_1 = arith.constant 0 : index
    %0 = vector.load %arg2[%c0, %c0_0, %c0_1] : memref<1x8x32xbf16, #tpu.memory_space<vmem>>, vector<1x8x32xbf16>
    %1 = vector.shape_cast %0 : vector<1x8x32xbf16> to vector<8x32xbf16>
    %2 = arith.extf %1 : vector<8x32xbf16> to vector<8x32xf32>
    %c0_2 = arith.constant 0 : index
    %c0_3 = arith.constant 0 : index
    %3 = vector.load %arg3[%c0_2, %c0_3] : memref<8x32xbf16, #tpu.memory_space<vmem>>, vector<8x32xbf16>
    %4 = arith.extf %3 : vector<8x32xbf16> to vector<8x32xf32>
    %5 = arith.addf %2, %4 : vector<8x32xf32>
    %c0_4 = arith.constant 0 : index
    %c0_5 = arith.constant 0 : index
    %6 = vector.load %arg4[%c0_4, %c0_5] : memref<1x32xbf16, #tpu.memory_space<vmem>>, vector<1x32xbf16>
    %7 = arith.extf %6 : vector<1x32xbf16> to vector<1x32xf32>
    %8 = vector.broadcast %7 : vector<1x32xf32> to vector<8x32xf32>
    %9 = arith.addf %5, %8 : vector<8x32xf32>
    %cst = arith.constant dense<0.000000e+00> : vector<8xf32>
    %10 = vector.multi_reduction <add>, %9, %cst [1] : vector<8x32xf32> to vector<8xf32>
    %11 = vector.shape_cast %10 : vector<8xf32> to vector<8x1xf32>
    %cst_6 = arith.constant 3.200000e+01 : f32
    %12 = vector.broadcast %cst_6 : f32 to vector<8x1xf32>
    %13 = arith.divf %11, %12 : vector<8x1xf32>
    %14 = vector.broadcast %13 : vector<8x1xf32> to vector<8x32xf32>
    %15 = arith.subf %9, %14 : vector<8x32xf32>
    %16 = arith.mulf %15, %15 : vector<8x32xf32>
    %cst_7 = arith.constant dense<0.000000e+00> : vector<8xf32>
    %17 = vector.multi_reduction <add>, %16, %cst_7 [1] : vector<8x32xf32> to vector<8xf32>
    %18 = vector.shape_cast %17 : vector<8xf32> to vector<8x1xf32>
    %cst_8 = arith.constant 3.200000e+01 : f32
    %19 = vector.broadcast %cst_8 : f32 to vector<8x1xf32>
    %20 = arith.divf %18, %19 : vector<8x1xf32>
    %21 = vector.broadcast %13 : vector<8x1xf32> to vector<8x32xf32>
    %22 = arith.subf %9, %21 : vector<8x32xf32>
    %cst_9 = arith.constant 9.99999996E-13 : f32
    %23 = vector.broadcast %cst_9 : f32 to vector<8x1xf32>
    %24 = arith.addf %20, %23 : vector<8x1xf32>
    %25 = math.rsqrt %24 : vector<8x1xf32>
    %26 = vector.broadcast %25 : vector<8x1xf32> to vector<8x32xf32>
    %27 = arith.mulf %22, %26 : vector<8x32xf32>
    %c0_10 = arith.constant 0 : index
    %c0_11 = arith.constant 0 : index
    %28 = vector.load %arg5[%c0_10, %c0_11] : memref<1x32xf32, #tpu.memory_space<vmem>>, vector<1x32xf32>
    %29 = vector.broadcast %28 : vector<1x32xf32> to vector<8x32xf32>
    %30 = arith.mulf %27, %29 : vector<8x32xf32>
    %c0_12 = arith.constant 0 : index
    %c0_13 = arith.constant 0 : index
    %31 = vector.load %arg6[%c0_12, %c0_13] : memref<1x32xf32, #tpu.memory_space<vmem>>, vector<1x32xf32>
    %32 = vector.broadcast %31 : vector<1x32xf32> to vector<8x32xf32>
    %33 = arith.addf %30, %32 : vector<8x32xf32>
    %34 = arith.truncf %33 : vector<8x32xf32> to vector<8x32xbf16>
    %c0_14 = arith.constant 0 : index
    %c0_15 = arith.constant 0 : index
    %c0_16 = arith.constant 0 : index
    %35 = vector.load %arg7[%c0_14, %c0_15, %c0_16] : memref<1x8x32xbf16, #tpu.memory_space<vmem>>, vector<1x8x32xbf16>
    %36 = vector.shape_cast %35 : vector<1x8x32xbf16> to vector<8x32xbf16>
    %37 = vector.shape_cast %34 : vector<8x32xbf16> to vector<1x8x32xbf16>
    tpu.vector_store %arg7[%c0_14, %c0_15, %c0_16], %37 {strides = array<i32>} : memref<1x8x32xbf16, #tpu.memory_space<vmem>>, vector<1x8x32xbf16>,
    return
  }
  func.func @transform_0(%arg0: i32, %arg1: i32) -> (i32, i32, i32) {
    %c0_i32 = arith.constant 0 : i32
    %c0_i32_0 = arith.constant 0 : i32
    return %arg0, %arg1, %c0_i32 : i32, i32, i32
  }
  func.func @transform_1(%arg0: i32, %arg1: i32) -> (i32, i32) {
    %c0_i32 = arith.constant 0 : i32
    %c0_i32_0 = arith.constant 0 : i32
    return %arg1, %c0_i32 : i32, i32
  }
  func.func @transform_2(%arg0: i32, %arg1: i32) -> (i32, i32) {
    %c0_i32 = arith.constant 0 : i32
    %c0_i32_0 = arith.constant 0 : i32
    %c0_i32_1 = arith.constant 0 : i32
    return %c0_i32, %c0_i32_0 : i32, i32
  }
  func.func @transform_3(%arg0: i32, %arg1: i32) -> (i32, i32) {
    %c0_i32 = arith.constant 0 : i32
    %c0_i32_0 = arith.constant 0 : i32
    %c0_i32_1 = arith.constant 0 : i32
    return %c0_i32, %c0_i32_0 : i32, i32
  }
  func.func @transform_4(%arg0: i32, %arg1: i32) -> (i32, i32) {
    %c0_i32 = arith.constant 0 : i32
    %c0_i32_0 = arith.constant 0 : i32
    %c0_i32_1 = arith.constant 0 : i32
    return %c0_i32, %c0_i32_0 : i32, i32
  }
  func.func @transform_5(%arg0: i32, %arg1: i32) -> (i32, i32, i32) {
    %c0_i32 = arith.constant 0 : i32
    %c0_i32_0 = arith.constant 0 : i32
    return %arg0, %arg1, %c0_i32 : i32, i32, i32
  }
}

module attributes {stable_mosaic.version = 11 : i64} {
  func.func @_dense_kernel(%arg0: i32, %arg1: memref<16x32xbf16, #tpu.memory_space<vmem>>, %arg2: memref<32x96xbf16, #tpu.memory_space<vmem>>, %arg3: memref<1x96xf32, #tpu.memory_space<vmem>>, %arg4: memref<16x96xbf16, #tpu.memory_space<vmem>>) attributes {dimension_semantics = [#tpu.dimension_semantics<parallel>], iteration_bounds = array<i64: 1>, scalar_prefetch = 0 : i64, scratch_operands = 0 : i64, tpu.core_type = #tpu.core_type<tc>, window_params = [{transform_indices = @transform_0, window_bounds = array<i64: 16, 32>}, {pipeline_mode = #tpu.pipeline_mode<synchronous>, transform_indices = @transform_1, window_bounds = array<i64: 32, 96>}, {pipeline_mode = #tpu.pipeline_mode<synchronous>, transform_indices = @transform_2, window_bounds = array<i64: 1, 96>}, {transform_indices = @transform_3, window_bounds = array<i64: 16, 96>}]} {
    %c0 = arith.constant 0 : index
    %c0_0 = arith.constant 0 : index
    %0 = vector.load %arg1[%c0, %c0_0] : memref<16x32xbf16, #tpu.memory_space<vmem>>, vector<16x32xbf16>
    %c0_1 = arith.constant 0 : index
    %c0_2 = arith.constant 0 : index
    %1 = vector.load %arg2[%c0_1, %c0_2] : memref<32x96xbf16, #tpu.memory_space<vmem>>, vector<32x96xbf16>
    %cst = arith.constant dense<0.000000e+00> : vector<16x96xf32>
    %2 = tpu.matmul %0, %1, %cst {dimension_numbers = #tpu.dot_dimension_numbers<[1], [0], [0], [1], [0, 0, 1, 1], [], []>} : vector<16x32xbf16>, vector<32x96xbf16>, vector<16x96xf32> -> vector<16x96xf32>
    %c0_3 = arith.constant 0 : index
    %c0_4 = arith.constant 0 : index
    %3 = vector.load %arg3[%c0_3, %c0_4] : memref<1x96xf32, #tpu.memory_space<vmem>>, vector<1x96xf32>
    %4 = vector.broadcast %3 : vector<1x96xf32> to vector<16x96xf32>
    %5 = arith.addf %2, %4 : vector<16x96xf32>
    %6 = arith.truncf %5 : vector<16x96xf32> to vector<16x96xbf16>
    %c0_5 = arith.constant 0 : index
    %c0_6 = arith.constant 0 : index
    %7 = vector.load %arg4[%c0_5, %c0_6] : memref<16x96xbf16, #tpu.memory_space<vmem>>, vector<16x96xbf16>
    tpu.vector_store %arg4[%c0_5, %c0_6], %6 {strides = array<i32>} : memref<16x96xbf16, #tpu.memory_space<vmem>>, vector<16x96xbf16>,
    return
  }
  func.func @transform_0(%arg0: i32) -> (i32, i32) {
    %c0_i32 = arith.constant 0 : i32
    %c0_i32_0 = arith.constant 0 : i32
    return %arg0, %c0_i32 : i32, i32
  }
  func.func @transform_1(%arg0: i32) -> (i32, i32) {
    %c0_i32 = arith.constant 0 : i32
    %c0_i32_0 = arith.constant 0 : i32
    %c0_i32_1 = arith.constant 0 : i32
    return %c0_i32, %c0_i32_0 : i32, i32
  }
  func.func @transform_2(%arg0: i32) -> (i32, i32) {
    %c0_i32 = arith.constant 0 : i32
    %c0_i32_0 = arith.constant 0 : i32
    %c0_i32_1 = arith.constant 0 : i32
    return %c0_i32, %c0_i32_0 : i32, i32
  }
  func.func @transform_3(%arg0: i32) -> (i32, i32) {
    %c0_i32 = arith.constant 0 : i32
    %c0_i32_0 = arith.constant 0 : i32
    return %arg0, %c0_i32 : i32, i32
  }
}

module attributes {stable_mosaic.version = 11 : i64} {
  func.func @_attention_kernel(%arg0: i32, %arg1: memref<1x8x96xbf16, #tpu.memory_space<vmem>>, %arg2: memref<1x1x8xf32, #tpu.memory_space<vmem>>, %arg3: memref<1x8x32xbf16, #tpu.memory_space<vmem>>) attributes {dimension_semantics = [#tpu.dimension_semantics<parallel>], iteration_bounds = array<i64: 2>, scalar_prefetch = 0 : i64, scratch_operands = 0 : i64, tpu.core_type = #tpu.core_type<tc>, window_params = [{transform_indices = @transform_0, window_bounds = array<i64: 1, 8, 96>}, {transform_indices = @transform_1, window_bounds = array<i64: 1, 1, 8>}, {transform_indices = @transform_2, window_bounds = array<i64: 1, 8, 32>}]} {
    %c0 = arith.constant 0 : index
    %c0_0 = arith.constant 0 : index
    %c0_1 = arith.constant 0 : index
    %0 = vector.load %arg2[%c0, %c0_0, %c0_1] : memref<1x1x8xf32, #tpu.memory_space<vmem>>, vector<1x1x8xf32>
    %1 = vector.shape_cast %0 : vector<1x1x8xf32> to vector<1x8xf32>
    %cst = arith.constant 1.000000e+00 : f32
    %2 = vector.broadcast %cst : f32 to vector<1x8xf32>
    %3 = arith.subf %2, %1 : vector<1x8xf32>
    %cst_2 = arith.constant -3.40282347E+38 : f32
    %4 = vector.broadcast %cst_2 : f32 to vector<1x8xf32>
    %5 = arith.mulf %3, %4 : vector<1x8xf32>
    %c0_3 = arith.constant 0 : index
    %c0_4 = arith.constant 0 : index
    %c0_5 = arith.constant 0 : index
    %6 = vector.load %arg1[%c0_3, %c0_4, %c0_5] : memref<1x8x96xbf16, #tpu.memory_space<vmem>>, vector<1x8x16xbf16>
    %7 = vector.shape_cast %6 : vector<1x8x16xbf16> to vector<8x16xbf16>
    %cst_6 = arith.constant 2.500000e-01 : bf16
    %8 = vector.broadcast %cst_6 : bf16 to vector<8x16xbf16>
    %9 = arith.mulf %7, %8 : vector<8x16xbf16>
    %c0_7 = arith.constant 0 : index
    %c0_8 = arith.constant 0 : index
    %c32 = arith.constant 32 : index
    %10 = vector.load %arg1[%c0_7, %c0_8, %c32] : memref<1x8x96xbf16, #tpu.memory_space<vmem>>, vector<1x8x16xbf16>
    %11 = vector.shape_cast %10 : vector<1x8x16xbf16> to vector<8x16xbf16>
    %c0_9 = arith.constant 0 : index
    %c0_10 = arith.constant 0 : index
    %c64 = arith.constant 64 : index
    %12 = vector.load %arg1[%c0_9, %c0_10, %c64] : memref<1x8x96xbf16, #tpu.memory_space<vmem>>, vector<1x8x16xbf16>
    %13 = vector.shape_cast %12 : vector<1x8x16xbf16> to vector<8x16xbf16>
    %cst_11 = arith.constant dense<0.000000e+00> : vector<8x8xf32>
    %14 = tpu.matmul %9, %11, %cst_11 {dimension_numbers = #tpu.dot_dimension_numbers<[1], [1], [0], [0], [0, 0, 1, 0], [], []>} : vector<8x16xbf16>, vector<8x16xbf16>, vector<8x8xf32> -> vector<8x8xf32>
    %15 = vector.broadcast %5 : vector<1x8xf32> to vector<8x8xf32>
    %16 = arith.addf %14, %15 : vector<8x8xf32>
    %cst_12 = arith.constant dense<0xFF800000> : vector<8xf32>
    %17 = vector.multi_reduction <maximumf>, %16, %cst_12 [1] : vector<8x8xf32> to vector<8xf32>
    %18 = vector.shape_cast %17 : vector<8xf32> to vector<8x1xf32>
    %19 = vector.broadcast %18 : vector<8x1xf32> to vector<8x8xf32>
    %20 = arith.subf %16, %19 : vector<8x8xf32>
    %21 = math.exp %20 : vector<8x8xf32>
    %cst_13 = arith.constant dense<0.000000e+00> : vector<8xf32>
    %22 = vector.multi_reduction <add>, %21, %cst_13 [1] : vector<8x8xf32> to vector<8xf32>
    %23 = vector.shape_cast %22 : vector<8xf32> to vector<8x1xf32>
    %24 = tpu.reciprocal %23 {approx = true} : vector<8x1xf32> -> vector<8x1xf32>
    %25 = arith.truncf %21 : vector<8x8xf32> to vector<8x8xbf16>
    %cst_14 = arith.constant dense<0.000000e+00> : vector<8x16xf32>
    %26 = tpu.matmul %25, %13, %cst_14 {dimension_numbers = #tpu.dot_dimension_numbers<[1], [0], [0], [1], [0, 0, 1, 1], [], []>} : vector<8x8xbf16>, vector<8x16xbf16>, vector<8x16xf32> -> vector<8x16xf32>
    %27 = vector.broadcast %24 : vector<8x1xf32> to vector<8x16xf32>
    %28 = arith.mulf %26, %27 : vector<8x16xf32>
    %29 = arith.truncf %28 : vector<8x16xf32> to vector<8x16xbf16>
    %c0_15 = arith.constant 0 : index
    %c0_16 = arith.constant 0 : index
    %c0_17 = arith.constant 0 : index
    %30 = vector.load %arg3[%c0_15, %c0_16, %c0_17] : memref<1x8x32xbf16, #tpu.memory_space<vmem>>, vector<1x8x16xbf16>
    %31 = vector.shape_cast %30 : vector<1x8x16xbf16> to vector<8x16xbf16>
    %32 = vector.shape_cast %29 : vector<8x16xbf16> to vector<1x8x16xbf16>
    tpu.vector_store %arg3[%c0_15, %c0_16, %c0_17], %32 {strides = array<i32>} : memref<1x8x32xbf16, #tpu.memory_space<vmem>>, vector<1x8x16xbf16>,
    %c0_18 = arith.constant 0 : index
    %c0_19 = arith.constant 0 : index
    %c16 = arith.constant 16 : index
    %33 = vector.load %arg1[%c0_18, %c0_19, %c16] : memref<1x8x96xbf16, #tpu.memory_space<vmem>>, vector<1x8x16xbf16>
    %34 = vector.shape_cast %33 : vector<1x8x16xbf16> to vector<8x16xbf16>
    %cst_20 = arith.constant 2.500000e-01 : bf16
    %35 = vector.broadcast %cst_20 : bf16 to vector<8x16xbf16>
    %36 = arith.mulf %34, %35 : vector<8x16xbf16>
    %c0_21 = arith.constant 0 : index
    %c0_22 = arith.constant 0 : index
    %c48 = arith.constant 48 : index
    %37 = vector.load %arg1[%c0_21, %c0_22, %c48] : memref<1x8x96xbf16, #tpu.memory_space<vmem>>, vector<1x8x16xbf16>
    %38 = vector.shape_cast %37 : vector<1x8x16xbf16> to vector<8x16xbf16>
    %c0_23 = arith.constant 0 : index
    %c0_24 = arith.constant 0 : index
    %c80 = arith.constant 80 : index
    %39 = vector.load %arg1[%c0_23, %c0_24, %c80] : memref<1x8x96xbf16, #tpu.memory_space<vmem>>, vector<1x8x16xbf16>
    %40 = vector.shape_cast %39 : vector<1x8x16xbf16> to vector<8x16xbf16>
    %cst_25 = arith.constant dense<0.000000e+00> : vector<8x8xf32>
    %41 = tpu.matmul %36, %38, %cst_25 {dimension_numbers = #tpu.dot_dimension_numbers<[1], [1], [0], [0], [0, 0, 1, 0], [], []>} : vector<8x16xbf16>, vector<8x16xbf16>, vector<8x8xf32> -> vector<8x8xf32>
    %42 = vector.broadcast %5 : vector<1x8xf32> to vector<8x8xf32>
    %43 = arith.addf %41, %42 : vector<8x8xf32>
    %cst_26 = arith.constant dense<0xFF800000> : vector<8xf32>
    %44 = vector.multi_reduction <maximumf>, %43, %cst_26 [1] : vector<8x8xf32> to vector<8xf32>
    %45 = vector.shape_cast %44 : vector<8xf32> to vector<8x1xf32>
    %46 = vector.broadcast %45 : vector<8x1xf32> to vector<8x8xf32>
    %47 = arith.subf %43, %46 : vector<8x8xf32>
    %48 = math.exp %47 : vector<8x8xf32>
    %cst_27 = arith.constant dense<0.000000e+00> : vector<8xf32>
    %49 = vector.multi_reduction <add>, %48, %cst_27 [1] : vector<8x8xf32> to vector<8xf32>
    %50 = vector.shape_cast %49 : vector<8xf32> to vector<8x1xf32>
    %51 = tpu.reciprocal %50 {approx = true} : vector<8x1xf32> -> vector<8x1xf32>
    %52 = arith.truncf %48 : vector<8x8xf32> to vector<8x8xbf16>
    %cst_28 = arith.constant dense<0.000000e+00> : vector<8x16xf32>
    %53 = tpu.matmul %52, %40, %cst_28 {dimension_numbers = #tpu.dot_dimension_numbers<[1], [0], [0], [1], [0, 0, 1, 1], [], []>} : vector<8x8xbf16>, vector<8x16xbf16>, vector<8x16xf32> -> vector<8x16xf32>
    %54 = vector.broadcast %51 : vector<8x1xf32> to vector<8x16xf32>
    %55 = arith.mulf %53, %54 : vector<8x16xf32>
    %56 = arith.truncf %55 : vector<8x16xf32> to vector<8x16xbf16>
    %c0_29 = arith.constant 0 : index
    %c0_30 = arith.constant 0 : index
    %c16_31 = arith.constant 16 : index
    %57 = vector.load %arg3[%c0_29, %c0_30, %c16_31] : memref<1x8x32xbf16, #tpu.memory_space<vmem>>, vector<1x8x16xbf16>
    %58 = vector.shape_cast %57 : vector<1x8x16xbf16> to vector<8x16xbf16>
    %59 = vector.shape_cast %56 : vector<8x16xbf16> to vector<1x8x16xbf16>
    tpu.vector_store %arg3[%c0_29, %c0_30, %c16_31], %59 {strides = array<i32>} : memref<1x8x32xbf16, #tpu.memory_space<vmem>>, vector<1x8x16xbf16>,
    return
  }
  func.func @transform_0(%arg0: i32) -> (i32, i32, i32) {
    %c0_i32 = arith.constant 0 : i32
    %c0_i32_0 = arith.constant 0 : i32
    %c0_i32_1 = arith.constant 0 : i32
    return %arg0, %c0_i32, %c0_i32_0 : i32, i32, i32
  }
  func.func @transform_1(%arg0: i32) -> (i32, i32, i32) {
    %c0_i32 = arith.constant 0 : i32
    %c0_i32_0 = arith.constant 0 : i32
    %c0_i32_1 = arith.constant 0 : i32
    return %arg0, %c0_i32, %c0_i32_0 : i32, i32, i32
  }
  func.func @transform_2(%arg0: i32) -> (i32, i32, i32) {
    %c0_i32 = arith.constant 0 : i32
    %c0_i32_0 = arith.constant 0 : i32
    %c0_i32_1 = arith.constant 0 : i32
    return %arg0, %c0_i32, %c0_i32_0 : i32, i32, i32
  }
}

module attributes {stable_mosaic.version = 11 : i64} {
  func.func @_dense_res_ln_kernel(%arg0: i32, %arg1: memref<16x32xbf16, #tpu.memory_space<vmem>>, %arg2: memref<32x32xbf16, #tpu.memory_space<vmem>>, %arg3: memref<1x32xf32, #tpu.memory_space<vmem>>, %arg4: memref<16x32xbf16, #tpu.memory_space<vmem>>, %arg5: memref<1x32xf32, #tpu.memory_space<vmem>>, %arg6: memref<1x32xf32, #tpu.memory_space<vmem>>, %arg7: memref<16x32xbf16, #tpu.memory_space<vmem>>) attributes {dimension_semantics = [#tpu.dimension_semantics<parallel>], iteration_bounds = array<i64: 1>, scalar_prefetch = 0 : i64, scratch_operands = 0 : i64, tpu.core_type = #tpu.core_type<tc>, window_params = [{transform_indices = @transform_0, window_bounds = array<i64: 16, 32>}, {pipeline_mode = #tpu.pipeline_mode<synchronous>, transform_indices = @transform_1, window_bounds = array<i64: 32, 32>}, {pipeline_mode = #tpu.pipeline_mode<synchronous>, transform_indices = @transform_2, window_bounds = array<i64: 1, 32>}, {transform_indices = @transform_3, window_bounds = array<i64: 16, 32>}, {pipeline_mode = #tpu.pipeline_mode<synchronous>, transform_indices = @transform_4, window_bounds = array<i64: 1, 32>}, {pipeline_mode = #tpu.pipeline_mode<synchronous>, transform_indices = @transform_5, window_bounds = array<i64: 1, 32>}, {transform_indices = @transform_6, window_bounds = array<i64: 16, 32>}]} {
    %c0 = arith.constant 0 : index
    %c0_0 = arith.constant 0 : index
    %0 = vector.load %arg1[%c0, %c0_0] : memref<16x32xbf16, #tpu.memory_space<vmem>>, vector<16x32xbf16>
    %c0_1 = arith.constant 0 : index
    %c0_2 = arith.constant 0 : index
    %1 = vector.load %arg2[%c0_1, %c0_2] : memref<32x32xbf16, #tpu.memory_space<vmem>>, vector<32x32xbf16>
    %cst = arith.constant dense<0.000000e+00> : vector<16x32xf32>
    %2 = tpu.matmul %0, %1, %cst {dimension_numbers = #tpu.dot_dimension_numbers<[1], [0], [0], [1], [0, 0, 1, 1], [], []>} : vector<16x32xbf16>, vector<32x32xbf16>, vector<16x32xf32> -> vector<16x32xf32>
    %c0_3 = arith.constant 0 : index
    %c0_4 = arith.constant 0 : index
    %3 = vector.load %arg3[%c0_3, %c0_4] : memref<1x32xf32, #tpu.memory_space<vmem>>, vector<1x32xf32>
    %4 = vector.broadcast %3 : vector<1x32xf32> to vector<16x32xf32>
    %5 = arith.addf %2, %4 : vector<16x32xf32>
    %c0_5 = arith.constant 0 : index
    %c0_6 = arith.constant 0 : index
    %6 = vector.load %arg4[%c0_5, %c0_6] : memref<16x32xbf16, #tpu.memory_space<vmem>>, vector<16x32xbf16>
    %7 = arith.extf %6 : vector<16x32xbf16> to vector<16x32xf32>
    %8 = arith.addf %5, %7 : vector<16x32xf32>
    %cst_7 = arith.constant dense<0.000000e+00> : vector<16xf32>
    %9 = vector.multi_reduction <add>, %8, %cst_7 [1] : vector<16x32xf32> to vector<16xf32>
    %10 = vector.shape_cast %9 : vector<16xf32> to vector<16x1xf32>
    %cst_8 = arith.constant 3.200000e+01 : f32
    %11 = vector.broadcast %cst_8 : f32 to vector<16x1xf32>
    %12 = arith.divf %10, %11 : vector<16x1xf32>
    %13 = vector.broadcast %12 : vector<16x1xf32> to vector<16x32xf32>
    %14 = arith.subf %8, %13 : vector<16x32xf32>
    %15 = arith.mulf %14, %14 : vector<16x32xf32>
    %cst_9 = arith.constant dense<0.000000e+00> : vector<16xf32>
    %16 = vector.multi_reduction <add>, %15, %cst_9 [1] : vector<16x32xf32> to vector<16xf32>
    %17 = vector.shape_cast %16 : vector<16xf32> to vector<16x1xf32>
    %cst_10 = arith.constant 3.200000e+01 : f32
    %18 = vector.broadcast %cst_10 : f32 to vector<16x1xf32>
    %19 = arith.divf %17, %18 : vector<16x1xf32>
    %20 = vector.broadcast %12 : vector<16x1xf32> to vector<16x32xf32>
    %21 = arith.subf %8, %20 : vector<16x32xf32>
    %cst_11 = arith.constant 9.99999996E-13 : f32
    %22 = vector.broadcast %cst_11 : f32 to vector<16x1xf32>
    %23 = arith.addf %19, %22 : vector<16x1xf32>
    %24 = math.rsqrt %23 : vector<16x1xf32>
    %25 = vector.broadcast %24 : vector<16x1xf32> to vector<16x32xf32>
    %26 = arith.mulf %21, %25 : vector<16x32xf32>
    %c0_12 = arith.constant 0 : index
    %c0_13 = arith.constant 0 : index
    %27 = vector.load %arg5[%c0_12, %c0_13] : memref<1x32xf32, #tpu.memory_space<vmem>>, vector<1x32xf32>
    %28 = vector.broadcast %27 : vector<1x32xf32> to vector<16x32xf32>
    %29 = arith.mulf %26, %28 : vector<16x32xf32>
    %c0_14 = arith.constant 0 : index
    %c0_15 = arith.constant 0 : index
    %30 = vector.load %arg6[%c0_14, %c0_15] : memref<1x32xf32, #tpu.memory_space<vmem>>, vector<1x32xf32>
    %31 = vector.broadcast %30 : vector<1x32xf32> to vector<16x32xf32>
    %32 = arith.addf %29, %31 : vector<16x32xf32>
    %33 = arith.truncf %32 : vector<16x32xf32> to vector<16x32xbf16>
    %c0_16 = arith.constant 0 : index
    %c0_17 = arith.constant 0 : index
    %34 = vector.load %arg7[%c0_16, %c0_17] : memref<16x32xbf16, #tpu.memory_space<vmem>>, vector<16x32xbf16>
    tpu.vector_store %arg7[%c0_16, %c0_17], %33 {strides = array<i32>} : memref<16x32xbf16, #tpu.memory_space<vmem>>, vector<16x32xbf16>,
    return
  }
  func.func @transform_0(%arg0: i32) -> (i32, i32) {
    %c0_i32 = arith.constant 0 : i32
    %c0_i32_0 = arith.constant 0 : i32
    return %arg0, %c0_i32 : i32, i32
  }
  func.func @transform_1(%arg0: i32) -> (i32, i32) {
    %c0_i32 = arith.constant 0 : i32
    %c0_i32_0 = arith.constant 0 : i32
    %c0_i32_1 = arith.constant 0 : i32
    return %c0_i32, %c0_i32_0 : i32, i32
  }
  func.func @transform_2(%arg0: i32) -> (i32, i32) {
    %c0_i32 = arith.constant 0 : i32
    %c0_i32_0 = arith.constant 0 : i32
    %c0_i32_1 = arith.constant 0 : i32
    return %c0_i32, %c0_i32_0 : i32, i32
  }
  func.func @transform_3(%arg0: i32) -> (i32, i32) {
    %c0_i32 = arith.constant 0 : i32
    %c0_i32_0 = arith.constant 0 : i32
    return %arg0, %c0_i32 : i32, i32
  }
  func.func @transform_4(%arg0: i32) -> (i32, i32) {
    %c0_i32 = arith.constant 0 : i32
    %c0_i32_0 = arith.constant 0 : i32
    %c0_i32_1 = arith.constant 0 : i32
    return %c0_i32, %c0_i32_0 : i32, i32
  }
  func.func @transform_5(%arg0: i32) -> (i32, i32) {
    %c0_i32 = arith.constant 0 : i32
    %c0_i32_0 = arith.constant 0 : i32
    %c0_i32_1 = arith.constant 0 : i32
    return %c0_i32, %c0_i32_0 : i32, i32
  }
  func.func @transform_6(%arg0: i32) -> (i32, i32) {
    %c0_i32 = arith.constant 0 : i32
    %c0_i32_0 = arith.constant 0 : i32
    return %arg0, %c0_i32 : i32, i32
  }
}

module attributes {stable_mosaic.version = 11 : i64} {
  func.func @_dense_kernel(%arg0: i32, %arg1: memref<16x32xbf16, #tpu.memory_space<vmem>>, %arg2: memref<32x64xbf16, #tpu.memory_space<vmem>>, %arg3: memref<1x64xf32, #tpu.memory_space<vmem>>, %arg4: memref<16x64xbf16, #tpu.memory_space<vmem>>) attributes {dimension_semantics = [#tpu.dimension_semantics<parallel>], iteration_bounds = array<i64: 1>, scalar_prefetch = 0 : i64, scratch_operands = 0 : i64, tpu.core_type = #tpu.core_type<tc>, window_params = [{transform_indices = @transform_0, window_bounds = array<i64: 16, 32>}, {pipeline_mode = #tpu.pipeline_mode<synchronous>, transform_indices = @transform_1, window_bounds = array<i64: 32, 64>}, {pipeline_mode = #tpu.pipeline_mode<synchronous>, transform_indices = @transform_2, window_bounds = array<i64: 1, 64>}, {transform_indices = @transform_3, window_bounds = array<i64: 16, 64>}]} {
    %c0 = arith.constant 0 : index
    %c0_0 = arith.constant 0 : index
    %0 = vector.load %arg1[%c0, %c0_0] : memref<16x32xbf16, #tpu.memory_space<vmem>>, vector<16x32xbf16>
    %c0_1 = arith.constant 0 : index
    %c0_2 = arith.constant 0 : index
    %1 = vector.load %arg2[%c0_1, %c0_2] : memref<32x64xbf16, #tpu.memory_space<vmem>>, vector<32x64xbf16>
    %cst = arith.constant dense<0.000000e+00> : vector<16x64xf32>
    %2 = tpu.matmul %0, %1, %cst {dimension_numbers = #tpu.dot_dimension_numbers<[1], [0], [0], [1], [0, 0, 1, 1], [], []>} : vector<16x32xbf16>, vector<32x64xbf16>, vector<16x64xf32> -> vector<16x64xf32>
    %c0_3 = arith.constant 0 : index
    %c0_4 = arith.constant 0 : index
    %3 = vector.load %arg3[%c0_3, %c0_4] : memref<1x64xf32, #tpu.memory_space<vmem>>, vector<1x64xf32>
    %4 = vector.broadcast %3 : vector<1x64xf32> to vector<16x64xf32>
    %5 = arith.addf %2, %4 : vector<16x64xf32>
    %cst_5 = arith.constant 5.000000e-01 : f32
    %6 = vector.broadcast %cst_5 : f32 to vector<16x64xf32>
    %7 = arith.mulf %6, %5 : vector<16x64xf32>
    %cst_6 = arith.constant 4.471500e-02 : f32
    %8 = vector.broadcast %cst_6 : f32 to vector<16x64xf32>
    %9 = arith.mulf %8, %5 : vector<16x64xf32>
    %10 = arith.mulf %9, %5 : vector<16x64xf32>
    %11 = arith.mulf %10, %5 : vector<16x64xf32>
    %12 = arith.addf %5, %11 : vector<16x64xf32>
    %cst_7 = arith.constant 0.797884583 : f32
    %13 = vector.broadcast %cst_7 : f32 to vector<16x64xf32>
    %14 = arith.mulf %13, %12 : vector<16x64xf32>
    %15 = math.tanh %14 : vector<16x64xf32>
    %cst_8 = arith.constant 1.000000e+00 : f32
    %16 = vector.broadcast %cst_8 : f32 to vector<16x64xf32>
    %17 = arith.addf %16, %15 : vector<16x64xf32>
    %18 = arith.mulf %7, %17 : vector<16x64xf32>
    %19 = arith.truncf %18 : vector<16x64xf32> to vector<16x64xbf16>
    %c0_9 = arith.constant 0 : index
    %c0_10 = arith.constant 0 : index
    %20 = vector.load %arg4[%c0_9, %c0_10] : memref<16x64xbf16, #tpu.memory_space<vmem>>, vector<16x64xbf16>
    tpu.vector_store %arg4[%c0_9, %c0_10], %19 {strides = array<i32>} : memref<16x64xbf16, #tpu.memory_space<vmem>>, vector<16x64xbf16>,
    return
  }
  func.func @transform_0(%arg0: i32) -> (i32, i32) {
    %c0_i32 = arith.constant 0 : i32
    %c0_i32_0 = arith.constant 0 : i32
    return %arg0, %c0_i32 : i32, i32
  }
  func.func @transform_1(%arg0: i32) -> (i32, i32) {
    %c0_i32 = arith.constant 0 : i32
    %c0_i32_0 = arith.constant 0 : i32
    %c0_i32_1 = arith.constant 0 : i32
    return %c0_i32, %c0_i32_0 : i32, i32
  }
  func.func @transform_2(%arg0: i32) -> (i32, i32) {
    %c0_i32 = arith.constant 0 : i32
    %c0_i32_0 = arith.constant 0 : i32
    %c0_i32_1 = arith.constant 0 : i32
    return %c0_i32, %c0_i32_0 : i32, i32
  }
  func.func @transform_3(%arg0: i32) -> (i32, i32) {
    %c0_i32 = arith.constant 0 : i32
    %c0_i32_0 = arith.constant 0 : i32
    return %arg0, %c0_i32 : i32, i32
  }
}

module attributes {stable_mosaic.version = 11 : i64} {
  func.func @_head_kernel(%arg0: i32, %arg1: memref<16x32xbf16, #tpu.memory_space<vmem>>, %arg2: memref<128x32xbf16, #tpu.memory_space<vmem>>, %arg3: memref<16x128xf32, #tpu.memory_space<vmem>>) attributes {dimension_semantics = [#tpu.dimension_semantics<parallel>], iteration_bounds = array<i64: 1>, scalar_prefetch = 0 : i64, scratch_operands = 0 : i64, tpu.core_type = #tpu.core_type<tc>, window_params = [{pipeline_mode = #tpu.pipeline_mode<synchronous>, transform_indices = @transform_0, window_bounds = array<i64: 16, 32>}, {transform_indices = @transform_1, window_bounds = array<i64: 128, 32>}, {transform_indices = @transform_2, window_bounds = array<i64: 16, 128>}]} {
    %c0 = arith.constant 0 : index
    %c0_0 = arith.constant 0 : index
    %0 = vector.load %arg1[%c0, %c0_0] : memref<16x32xbf16, #tpu.memory_space<vmem>>, vector<16x32xbf16>
    %c0_1 = arith.constant 0 : index
    %c0_2 = arith.constant 0 : index
    %1 = vector.load %arg2[%c0_1, %c0_2] : memref<128x32xbf16, #tpu.memory_space<vmem>>, vector<128x32xbf16>
    %cst = arith.constant dense<0.000000e+00> : vector<16x128xf32>
    %2 = tpu.matmul %0, %1, %cst {dimension_numbers = #tpu.dot_dimension_numbers<[1], [1], [0], [0], [0, 0, 1, 0], [], []>} : vector<16x32xbf16>, vector<128x32xbf16>, vector<16x128xf32> -> vector<16x128xf32>
    %c0_3 = arith.constant 0 : index
    %c0_4 = arith.constant 0 : index
    %3 = vector.load %arg3[%c0_3, %c0_4] : memref<16x128xf32, #tpu.memory_space<vmem>>, vector<16x128xf32>
    tpu.vector_store %arg3[%c0_3, %c0_4], %2 {strides = array<i32>} : memref<16x128xf32, #tpu.memory_space<vmem>>, vector<16x128xf32>,
    return
  }
  func.func @transform_0(%arg0: i32) -> (i32, i32) {
    %c0_i32 = arith.constant 0 : i32
    %c0_i32_0 = arith.constant 0 : i32
    %c0_i32_1 = arith.constant 0 : i32
    return %c0_i32, %c0_i32_0 : i32, i32
  }
  func.func @transform_1(%arg0: i32) -> (i32, i32) {
    %c0_i32 = arith.constant 0 : i32
    %c0_i32_0 = arith.constant 0 : i32
    return %arg0, %c0_i32 : i32, i32
  }
  func.func @transform_2(%arg0: i32) -> (i32, i32) {
    %c0_i32 = arith.constant 0 : i32
    %c0_i32_0 = arith.constant 0 : i32
    return %c0_i32, %arg0 : i32, i32
  }
}

module attributes {stable_mosaic.version = 11 : i64} {
  func.func @_dense_res_ln_kernel(%arg0: i32, %arg1: memref<16x64xbf16, #tpu.memory_space<vmem>>, %arg2: memref<64x32xbf16, #tpu.memory_space<vmem>>, %arg3: memref<1x32xf32, #tpu.memory_space<vmem>>, %arg4: memref<16x32xbf16, #tpu.memory_space<vmem>>, %arg5: memref<1x32xf32, #tpu.memory_space<vmem>>, %arg6: memref<1x32xf32, #tpu.memory_space<vmem>>, %arg7: memref<16x32xbf16, #tpu.memory_space<vmem>>) attributes {dimension_semantics = [#tpu.dimension_semantics<parallel>], iteration_bounds = array<i64: 1>, scalar_prefetch = 0 : i64, scratch_operands = 0 : i64, tpu.core_type = #tpu.core_type<tc>, window_params = [{transform_indices = @transform_0, window_bounds = array<i64: 16, 64>}, {pipeline_mode = #tpu.pipeline_mode<synchronous>, transform_indices = @transform_1, window_bounds = array<i64: 64, 32>}, {pipeline_mode = #tpu.pipeline_mode<synchronous>, transform_indices = @transform_2, window_bounds = array<i64: 1, 32>}, {transform_indices = @transform_3, window_bounds = array<i64: 16, 32>}, {pipeline_mode = #tpu.pipeline_mode<synchronous>, transform_indices = @transform_4, window_bounds = array<i64: 1, 32>}, {pipeline_mode = #tpu.pipeline_mode<synchronous>, transform_indices = @transform_5, window_bounds = array<i64: 1, 32>}, {transform_indices = @transform_6, window_bounds = array<i64: 16, 32>}]} {
    %c0 = arith.constant 0 : index
    %c0_0 = arith.constant 0 : index
    %0 = vector.load %arg1[%c0, %c0_0] : memref<16x64xbf16, #tpu.memory_space<vmem>>, vector<16x64xbf16>
    %c0_1 = arith.constant 0 : index
    %c0_2 = arith.constant 0 : index
    %1 = vector.load %arg2[%c0_1, %c0_2] : memref<64x32xbf16, #tpu.memory_space<vmem>>, vector<64x32xbf16>
    %cst = arith.constant dense<0.000000e+00> : vector<16x32xf32>
    %2 = tpu.matmul %0, %1, %cst {dimension_numbers = #tpu.dot_dimension_numbers<[1], [0], [0], [1], [0, 0, 1, 1], [], []>} : vector<16x64xbf16>, vector<64x32xbf16>, vector<16x32xf32> -> vector<16x32xf32>
    %c0_3 = arith.constant 0 : index
    %c0_4 = arith.constant 0 : index
    %3 = vector.load %arg3[%c0_3, %c0_4] : memref<1x32xf32, #tpu.memory_space<vmem>>, vector<1x32xf32>
    %4 = vector.broadcast %3 : vector<1x32xf32> to vector<16x32xf32>
    %5 = arith.addf %2, %4 : vector<16x32xf32>
    %c0_5 = arith.constant 0 : index
    %c0_6 = arith.constant 0 : index
    %6 = vector.load %arg4[%c0_5, %c0_6] : memref<16x32xbf16, #tpu.memory_space<vmem>>, vector<16x32xbf16>
    %7 = arith.extf %6 : vector<16x32xbf16> to vector<16x32xf32>
    %8 = arith.addf %5, %7 : vector<16x32xf32>
    %cst_7 = arith.constant dense<0.000000e+00> : vector<16xf32>
    %9 = vector.multi_reduction <add>, %8, %cst_7 [1] : vector<16x32xf32> to vector<16xf32>
    %10 = vector.shape_cast %9 : vector<16xf32> to vector<16x1xf32>
    %cst_8 = arith.constant 3.200000e+01 : f32
    %11 = vector.broadcast %cst_8 : f32 to vector<16x1xf32>
    %12 = arith.divf %10, %11 : vector<16x1xf32>
    %13 = vector.broadcast %12 : vector<16x1xf32> to vector<16x32xf32>
    %14 = arith.subf %8, %13 : vector<16x32xf32>
    %15 = arith.mulf %14, %14 : vector<16x32xf32>
    %cst_9 = arith.constant dense<0.000000e+00> : vector<16xf32>
    %16 = vector.multi_reduction <add>, %15, %cst_9 [1] : vector<16x32xf32> to vector<16xf32>
    %17 = vector.shape_cast %16 : vector<16xf32> to vector<16x1xf32>
    %cst_10 = arith.constant 3.200000e+01 : f32
    %18 = vector.broadcast %cst_10 : f32 to vector<16x1xf32>
    %19 = arith.divf %17, %18 : vector<16x1xf32>
    %20 = vector.broadcast %12 : vector<16x1xf32> to vector<16x32xf32>
    %21 = arith.subf %8, %20 : vector<16x32xf32>
    %cst_11 = arith.constant 9.99999996E-13 : f32
    %22 = vector.broadcast %cst_11 : f32 to vector<16x1xf32>
    %23 = arith.addf %19, %22 : vector<16x1xf32>
    %24 = math.rsqrt %23 : vector<16x1xf32>
    %25 = vector.broadcast %24 : vector<16x1xf32> to vector<16x32xf32>
    %26 = arith.mulf %21, %25 : vector<16x32xf32>
    %c0_12 = arith.constant 0 : index
    %c0_13 = arith.constant 0 : index
    %27 = vector.load %arg5[%c0_12, %c0_13] : memref<1x32xf32, #tpu.memory_space<vmem>>, vector<1x32xf32>
    %28 = vector.broadcast %27 : vector<1x32xf32> to vector<16x32xf32>
    %29 = arith.mulf %26, %28 : vector<16x32xf32>
    %c0_14 = arith.constant 0 : index
    %c0_15 = arith.constant 0 : index
    %30 = vector.load %arg6[%c0_14, %c0_15] : memref<1x32xf32, #tpu.memory_space<vmem>>, vector<1x32xf32>
    %31 = vector.broadcast %30 : vector<1x32xf32> to vector<16x32xf32>
    %32 = arith.addf %29, %31 : vector<16x32xf32>
    %33 = arith.truncf %32 : vector<16x32xf32> to vector<16x32xbf16>
    %c0_16 = arith.constant 0 : index
    %c0_17 = arith.constant 0 : index
    %34 = vector.load %arg7[%c0_16, %c0_17] : memref<16x32xbf16, #tpu.memory_space<vmem>>, vector<16x32xbf16>
    tpu.vector_store %arg7[%c0_16, %c0_17], %33 {strides = array<i32>} : memref<16x32xbf16, #tpu.memory_space<vmem>>, vector<16x32xbf16>,
    return
  }
  func.func @transform_0(%arg0: i32) -> (i32, i32) {
    %c0_i32 = arith.constant 0 : i32
    %c0_i32_0 = arith.constant 0 : i32
    return %arg0, %c0_i32 : i32, i32
  }
  func.func @transform_1(%arg0: i32) -> (i32, i32) {
    %c0_i32 = arith.constant 0 : i32
    %c0_i32_0 = arith.constant 0 : i32
    %c0_i32_1 = arith.constant 0 : i32
    return %c0_i32, %c0_i32_0 : i32, i32
  }
  func.func @transform_2(%arg0: i32) -> (i32, i32) {
    %c0_i32 = arith.constant 0 : i32
    %c0_i32_0 = arith.constant 0 : i32
    %c0_i32_1 = arith.constant 0 : i32
    return %c0_i32, %c0_i32_0 : i32, i32
  }
  func.func @transform_3(%arg0: i32) -> (i32, i32) {
    %c0_i32 = arith.constant 0 : i32
    %c0_i32_0 = arith.constant 0 : i32
    return %arg0, %c0_i32 : i32, i32
  }
  func.func @transform_4(%arg0: i32) -> (i32, i32) {
    %c0_i32 = arith.constant 0 : i32
    %c0_i32_0 = arith.constant 0 : i32
    %c0_i32_1 = arith.constant 0 : i32
    return %c0_i32, %c0_i32_0 : i32, i32
  }
  func.func @transform_5(%arg0: i32) -> (i32, i32) {
    %c0_i32 = arith.constant 0 : i32
    %c0_i32_0 = arith.constant 0 : i32
    %c0_i32_1 = arith.constant 0 : i32
    return %c0_i32, %c0_i32_0 : i32, i32
  }
  func.func @transform_6(%arg0: i32) -> (i32, i32) {
    %c0_i32 = arith.constant 0 : i32
    %c0_i32_0 = arith.constant 0 : i32
    return %arg0, %c0_i32 : i32, i32
  }
}

</mosaic_0001>

<llo_original>
// kernel: bert4rec_forward.12
$region0: #{bert4rec_forward.12}
  #allocation0 [shape = 'u32[]', space=smem, size = 0x4, offset = 0x4, fixed_abs, tag = 'smem constant byte address 0x4 - core index']
  #allocation1 [shape = 'u32[144,128]{1,0:T(1,128)}', space=vmem, size = 0x12000, scoped, tag = 'internal scratch']
  %s0 = inlined_call_operand.vmem [shape: bf16[2,8,32], index: 0, kind: input, shape index: {}]
  %s1 = inlined_call_operand.vmem [shape: bf16[8,32], index: 1, kind: input, shape index: {}]
  %s2 = inlined_call_operand.vmem [shape: bf16[1,32], index: 2, kind: input, shape index: {}]
  %s3 = inlined_call_operand.vmem [shape: f32[1,32], index: 3, kind: input, shape index: {}]
  %s4 = inlined_call_operand.vmem [shape: f32[1,32], index: 4, kind: input, shape index: {}]
  %s5 = inlined_call_operand.vmem [shape: bf16[2,8,32], index: 5, kind: output, shape index: {}]
  %s6 = sld [smem:[#allocation0]]
  $region53: #{bert4rec_forward.12} parent=0
    _
  %s8 = ssub.s32 1, %s6
  %s9 = scalar_select 0, %s8, %s6
  loop: start=0, step=1, limit=4
  $region2: #{bert4rec_forward.12} parent=0 // loop_pre_header
    _
  $region3: #{bert4rec_forward.12} parent=0 // loop_header
    %s11 = sphi 0, %s15
    %p12 = scmp.ge.s32.totalorder %s11, 4
    %s18 = sphi 0, %s30
    %s19 = sphi 0, %s26
    %s20 = sphi 0, %s18
    %s21 = sphi 0, %s19
    %s22 = sphi 0, %s20
    %s23 = sphi 0, %s21
    %s35 = sphi 0, %s37
    %s38 = sphi 0, %s35
    %s39 = sphi 0, %s38
    %s55 = sphi 0, %s39
    %s61 = sphi 0, %s63
    %s64 = sphi 0, %s61
    %s65 = sphi 0, %s64
    %s81 = sphi 0, %s65
    %s85 = sphi 0, %s85
    %s87 = sphi 0, %s85
    %s88 = sphi 0, %s87
    %s102 = sphi 0, %s88
    %s106 = sphi 0, %s106
    %s108 = sphi 0, %s106
    %s109 = sphi 0, %s108
    %s123 = sphi 0, %s109
    %s127 = sphi 0, %s127
    %s129 = sphi 0, %s127
    %s130 = sphi 0, %s129
    %s144 = sphi 0, %s130
    %s152 = sphi 0, %s154
    %s155 = sphi 0, %s152
    %s156 = sphi 0, %s155
    %s172 = sphi 0, %s156
  $region4: #{bert4rec_forward.12} parent=0 // loop_header_branch
    %14 = sbr.rel (%p12) target = $region8
  $region5: #{bert4rec_forward.12} parent=0 // loop_body
    %s16 = ssub.s32 %s11, 1
    %s17 = ssub.s32 %s11, 2
    %s24 = sadd.s32 1, %s19
    %p25 = scmp.ge.s32.totalorder %s24, 1
    %s26 = scalar_select %p25, 0, %s24
    %s27 = sadd.s32 1, %s18
    %s28 = scalar_select %p25, %s27, %s18
    %p29 = scmp.ge.s32.totalorder %s28, 2
    %s30 = scalar_select %p29, 0, %s28
    %s31 = ssub.s32 %s18, %s30
    %s32 = ssub.s32 %s19, %s26
    %s33 = sor.u32 %s31, %s32
    %p34 = scmp.eq.s32.totalorder %s33, 0
    %s36 = sadd.s32 %s35, 1
    %s37 = scalar_select %p34, %s35, %s36
    %p40 = pneg %p34
    %p41 = scmp.eq.s32.totalorder %s11, 1
    %p42 = por %p40, %p41
    %p43 = scmp.ne.s32.totalorder %s35, %s38
    %p44 = scmp.eq.s32.totalorder %s11, 0
    %p45 = por %p43, %p44
    %p46 = scmp.ne.s32.totalorder %s35, %s38
    %p47 = scmp.eq.s32.totalorder %s16, 1
    %p48 = por %p46, %p47
    %p49 = scmp.ne.s32.totalorder %s38, %s39
    %p50 = scmp.eq.s32.totalorder %s16, 0
    %p51 = por %p49, %p50
    %p52 = scmp.ne.s32.totalorder %s38, %s39
    %p53 = scmp.eq.s32.totalorder %s17, 1
    %p54 = por %p52, %p53
    %p56 = scmp.ne.s32.totalorder %s39, %s55
    %p57 = scmp.eq.s32.totalorder %s17, 0
    %p58 = por %p56, %p57
    %s59 = ssub.s32 %s19, %s26
    %p60 = scmp.eq.s32.totalorder %s59, 0
    %s62 = sadd.s32 %s61, 1
    %s63 = scalar_select %p60, %s61, %s62
    %p66 = pneg %p60
    %p67 = scmp.eq.s32.totalorder %s11, 1
    %p68 = por %p66, %p67
    %p69 = scmp.ne.s32.totalorder %s61, %s64
    %p70 = scmp.eq.s32.totalorder %s11, 0
    %p71 = por %p69, %p70
    %p72 = scmp.ne.s32.totalorder %s61, %s64
    %p73 = scmp.eq.s32.totalorder %s16, 1
    %p74 = por %p72, %p73
    %p75 = scmp.ne.s32.totalorder %s64, %s65
    %p76 = scmp.eq.s32.totalorder %s16, 0
    %p77 = por %p75, %p76
    %p78 = scmp.ne.s32.totalorder %s64, %s65
    %p79 = scmp.eq.s32.totalorder %s17, 1
    %p80 = por %p78, %p79
    %p82 = scmp.ne.s32.totalorder %s65, %s81
    %p83 = scmp.eq.s32.totalorder %s17, 0
    %p84 = por %p82, %p83
    %s86 = sadd.s32 %s85, 1
    %p89 = scmp.eq.s32.totalorder %s11, 1
    %p90 = scmp.ne.s32.totalorder %s85, %s87
    %p91 = scmp.eq.s32.totalorder %s11, 0
    %p92 = por %p90, %p91
    %p93 = scmp.ne.s32.totalorder %s85, %s87
    %p94 = scmp.eq.s32.totalorder %s16, 1
    %p95 = por %p93, %p94
    %p96 = scmp.ne.s32.totalorder %s87, %s88
    %p97 = scmp.eq.s32.totalorder %s16, 0
    %p98 = por %p96, %p97
    %p99 = scmp.ne.s32.totalorder %s87, %s88
    %p100 = scmp.eq.s32.totalorder %s17, 1
    %p101 = por %p99, %p100
    %p103 = scmp.ne.s32.totalorder %s88, %s102
    %p104 = scmp.eq.s32.totalorder %s17, 0
    %p105 = por %p103, %p104
    %s107 = sadd.s32 %s106, 1
    %p110 = scmp.eq.s32.totalorder %s11, 1
    %p111 = scmp.ne.s32.totalorder %s106, %s108
    %p112 = scmp.eq.s32.totalorder %s11, 0
    %p113 = por %p111, %p112
    %p114 = scmp.ne.s32.totalorder %s106, %s108
    %p115 = scmp.eq.s32.totalorder %s16, 1
    %p116 = por %p114, %p115
    %p117 = scmp.ne.s32.totalorder %s108, %s109
    %p118 = scmp.eq.s32.totalorder %s16, 0
    %p119 = por %p117, %p118
    %p120 = scmp.ne.s32.totalorder %s108, %s109
    %p121 = scmp.eq.s32.totalorder %s17, 1
    %p122 = por %p120, %p121
    %p124 = scmp.ne.s32.totalorder %s109, %s123
    %p125 = scmp.eq.s32.totalorder %s17, 0
    %p126 = por %p124, %p125
    %s128 = sadd.s32 %s127, 1
    %p131 = scmp.eq.s32.totalorder %s11, 1
    %p132 = scmp.ne.s32.totalorder %s127, %s129
    %p133 = scmp.eq.s32.totalorder %s11, 0
    %p134 = por %p132, %p133
    %p135 = scmp.ne.s32.totalorder %s127, %s129
    %p136 = scmp.eq.s32.totalorder %s16, 1
    %p137 = por %p135, %p136
    %p138 = scmp.ne.s32.totalorder %s129, %s130
    %p139 = scmp.eq.s32.totalorder %s16, 0
    %p140 = por %p138, %p139
    %p141 = scmp.ne.s32.totalorder %s129, %s130
    %p142 = scmp.eq.s32.totalorder %s17, 1
    %p143 = por %p141, %p142
    %p145 = scmp.ne.s32.totalorder %s130, %s144
    %p146 = scmp.eq.s32.totalorder %s17, 0
    %p147 = por %p145, %p146
    %s148 = ssub.s32 %s18, %s30
    %s149 = ssub.s32 %s19, %s26
    %s150 = sor.u32 %s148, %s149
    %p151 = scmp.eq.s32.totalorder %s150, 0
    %s153 = sadd.s32 %s152, 1
    %s154 = scalar_select %p151, %s152, %s153
    %p157 = pneg %p151
    %p158 = scmp.eq.s32.totalorder %s11, 1
    %p159 = por %p157, %p158
    %p160 = scmp.ne.s32.totalorder %s152, %s155
    %p161 = scmp.eq.s32.totalorder %s11, 0
    %p162 = por %p160, %p161
    %p163 = scmp.ne.s32.totalorder %s152, %s155
    %p164 = scmp.eq.s32.totalorder %s16, 1
    %p165 = por %p163, %p164
    %p166 = scmp.ne.s32.totalorder %s155, %s156
    %p167 = scmp.eq.s32.totalorder %s16, 0
    %p168 = por %p166, %p167
    %p169 = scmp.ne.s32.totalorder %s155, %s156
    %p170 = scmp.eq.s32.totalorder %s17, 1
    %p171 = por %p169, %p170
    %p173 = scmp.ne.s32.totalorder %s156, %s172
    %p174 = scmp.eq.s32.totalorder %s17, 0
    %p175 = por %p173, %p174
    %p176 = scmp.le.s32.totalorder 1, %s11
    %p177 = scmp.lt.s32.totalorder %s11, 3
    %p178 = pnand %p176, %p177
    %p179 = pneg %p178
    // Predicated region
    $region9: #{bert4rec_forward.12} parent=5 // pred_check
      _
    $region10: #{bert4rec_forward.12} parent=5 // pred_check_branch
      %181 = sbr.rel (%p178) target = $region12
    $region11: #{bert4rec_forward.12} parent=5 // pred_region
      %s182 = ssub.s32 %s11, 1
      // Predicated region
      $region13: #{bert4rec_forward.12} parent=11 // pred_check
        %p183 = pneg %p77
      $region14: #{bert4rec_forward.12} parent=11 // pred_check_branch
        %185 = sbr.rel (%p183) target = $region16
      $region15: #{bert4rec_forward.12} parent=11 // pred_region
        %p186 = scmp.lt.s32.totalorder %s21, 0
        %s187 = scalar_select %p186, %s21, 0
        %s188 = smul.addr %s187, 4
        %s189 = scalar_lea.vmem %s1, %s188
      $region16: #{bert4rec_forward.12} parent=11 // pred_fallthru
        _
      // Predicated region
      $region17: #{bert4rec_forward.12} parent=11 // pred_check
        %p190 = pneg %p98
      $region18: #{bert4rec_forward.12} parent=11 // pred_check_branch
        %192 = sbr.rel (%p190) target = $region20
      $region19: #{bert4rec_forward.12} parent=11 // pred_region
        _
      $region20: #{bert4rec_forward.12} parent=11 // pred_fallthru
        _
      // Predicated region
      $region21: #{bert4rec_forward.12} parent=11 // pred_check
        %p193 = pneg %p119
      $region22: #{bert4rec_forward.12} parent=11 // pred_check_branch
        %195 = sbr.rel (%p193) target = $region24
      $region23: #{bert4rec_forward.12} parent=11 // pred_region
        _
      $region24: #{bert4rec_forward.12} parent=11 // pred_fallthru
        _
      // Predicated region
      $region25: #{bert4rec_forward.12} parent=11 // pred_check
        %p196 = pneg %p140
      $region26: #{bert4rec_forward.12} parent=11 // pred_check_branch
        %198 = sbr.rel (%p196) target = $region28
      $region27: #{bert4rec_forward.12} parent=11 // pred_region
        _
      $region28: #{bert4rec_forward.12} parent=11 // pred_fallthru
        _
    $region12: #{bert4rec_forward.12} parent=5 // pred_fallthru
      _
    %p199 = scmp.lt.s32.totalorder %s11, 2
    // Predicated region
    $region29: #{bert4rec_forward.12} parent=5 // pred_check
      %p200 = pneg %p199
    $region30: #{bert4rec_forward.12} parent=5 // pred_check_branch
      %202 = sbr.rel (%p200) target = $region32
    $region31: #{bert4rec_forward.12} parent=5 // pred_region
      // Predicated region
      $region33: #{bert4rec_forward.12} parent=31 // pred_check
        %p203 = pneg %p45
      $region34: #{bert4rec_forward.12} parent=31 // pred_check_branch
        %205 = sbr.rel (%p203) target = $region36
      $region35: #{bert4rec_forward.12} parent=31 // pred_region
        %p206 = scmp.lt.s32.totalorder %s18, 1
        %s207 = scalar_select %p206, %s18, 1
        %p208 = scmp.lt.s32.totalorder %s19, 0
        %s209 = scalar_select %p208, %s19, 0
        %s210 = sadd.s32 %s209, %s207
        %s211 = smul.addr %s210, 4
        %s212 = scalar_lea.vmem %s0, %s211
      $region36: #{bert4rec_forward.12} parent=31 // pred_fallthru
        _
    $region32: #{bert4rec_forward.12} parent=5 // pred_fallthru
      _
    %p213 = scmp.le.s32.totalorder 1, %s11
    %p214 = scmp.lt.s32.totalorder %s11, 3
    %p215 = pnand %p213, %p214
    %p216 = pneg %p215
    // Predicated region
    $region37: #{bert4rec_forward.12} parent=5 // pred_check
      _
    $region38: #{bert4rec_forward.12} parent=5 // pred_check_branch
      %218 = sbr.rel (%p215) target = $region40
    $region39: #{bert4rec_forward.12} parent=5 // pred_region
      %s219 = ssub.s32 %s11, 1
      %p220 = scmp.lt.s32.totalorder %s20, 1
      %s221 = scalar_select %p220, %s20, 1
      %p222 = scmp.lt.s32.totalorder %s21, 0
      %s223 = scalar_select %p222, %s21, 0
      %s224 = sadd.s32 %s223, %s221
      %s225 = smul.addr %s224, 4
      %s226 = scalar_lea.vmem %s0, %s225
      %p227 = pneg %p51
      %p228 = pneg %p48
      %p229 = scmp.lt.s32.totalorder %s21, 0
      %s230 = scalar_select %p229, %s21, 0
      %s231 = smul.addr %s230, 4
      %s232 = scalar_lea.vmem %s1, %s231
      %p233 = pneg %p77
      %p234 = pneg %p74
      %p235 = pneg %p98
      %p236 = pneg %p95
      %p237 = pneg %p119
      %p238 = pneg %p116
      %p239 = pneg %p140
      %p240 = pneg %p137
      %p241 = pneg %p168
      %p242 = pneg %p165
      %p243 = scmp.lt.s32.totalorder %s20, 1
      %s244 = scalar_select %p243, %s20, 1
      %p245 = scmp.lt.s32.totalorder %s21, 0
      %s246 = scalar_select %p245, %s21, 0
      %s247 = sadd.s32 %s246, %s244
      %s248 = smul.addr %s247, 4
      %s249 = scalar_lea.vmem %s5, %s248
      %p250 = scmp.lt.s32.totalorder %s20, 1
      %s251 = scalar_select %p250, %s20, 1
      %p252 = scmp.lt.s32.totalorder %s21, 0
      %s253 = scalar_select %p252, %s21, 0
      %s254 = sadd.s32 %s253, %s251
      %s255 = smul.addr %s254, 4
      %s256 = scalar_lea.vmem %s0, %s255
      %p257 = scmp.lt.s32.totalorder %s21, 0
      %s258 = scalar_select %p257, %s21, 0
      %s259 = smul.addr %s258, 4
      %s260 = scalar_lea.vmem %s1, %s259
      %p261 = scmp.lt.s32.totalorder %s20, 1
      %s262 = scalar_select %p261, %s20, 1
      %p263 = scmp.lt.s32.totalorder %s21, 0
      %s264 = scalar_select %p263, %s21, 0
      %s265 = sadd.s32 %s264, %s262
      %s266 = smul.addr %s265, 4
      %s267 = scalar_lea.vmem %s5, %s266
      %v268 = vld [vmem:[%s256] sm:$0xf]
      %v269 = vunpack.c.l.bf16 %v268
      %v270 = vld [vmem:[%s260] sm:$0xf]
      %v271 = vunpack.c.l.bf16 %v270
      %v272 = vadd.f32 %v269, %v271
      %v273 = vld [vmem:[%s2] sm:$0x1]
      %v274 = vunpack.c.l.bf16 %v273
      %v275 = vlaneseq
      %v276 = vshrl.u32 %v275, 7
      %v277 = vsub.s32 0, %v276
      %v278 = vrot.slane %v274, %v277
      %v279 = vadd.f32 %v272, %v278
      %vm280 = vcmask 261120
      %v281 = vsel %vm280, %v279, 0.0
      %282 = vadd.xlane.f32.xlu0 %v281
      %v283 = vpop.xlane.xlu0 %282
      %v284 = vrcp.pop 32.0
      %v285 = vmul.f32 %v283, %v284
      %v286 = vsub.f32 %v279, %v285
      %v287 = vmul.f32 %v286, %v286
      %v288 = vsel %vm280, %v287, 0.0
      %289 = vadd.xlane.f32.xlu0 %v288
      %v290 = vpop.xlane.xlu0 %289
      %v291 = vmul.f32 %v290, %v284
      %v292 = vadd.f32 %v291, 1e-12
      %v293 = vrsqrt.pop %v292
      %v294 = vmul.f32 %v286, %v293
      %v295 = vld [vmem:[%s3] sm:$0x1]
      %v297 = vlaneseq
      %v298 = vshrl.u32 %v297, 7
      %v299 = vsub.s32 0, %v298
      %v300 = vrot.slane %v295, %v299
      %v302 = vmul.f32 %v294, %v300
      %v303 = vld [vmem:[%s4] sm:$0x1]
      %v305 = vlaneseq
      %v306 = vshrl.u32 %v305, 7
      %v307 = vsub.s32 0, %v306
      %v308 = vrot.slane %v303, %v307
      %v310 = vadd.f32 %v302, %v308
      %v311 = vpack.c.bf16 %v310, %v310
      %vm312 = vcmask 257024
      %313 = vst.msk [vmem:[%s267] sm:$0xf] %vm312, %v311
      %p314 = scmp.lt.s32.totalorder %s20, 1
      %s315 = scalar_select %p314, %s20, 1
      %p316 = scmp.lt.s32.totalorder %s21, 0
      %s317 = scalar_select %p316, %s21, 0
      %s318 = sadd.s32 %s317, %s315
      %s319 = smul.addr %s318, 4
      %s320 = scalar_lea.vmem %s5, %s319
      // Predicated region
      $region41: #{bert4rec_forward.12} parent=39 // pred_check
        %p321 = pneg %p165
      $region42: #{bert4rec_forward.12} parent=39 // pred_check_branch
        %323 = sbr.rel (%p321) target = $region44
      $region43: #{bert4rec_forward.12} parent=39 // pred_region
        _
      $region44: #{bert4rec_forward.12} parent=39 // pred_fallthru
        _
    $region40: #{bert4rec_forward.12} parent=5 // pred_fallthru
      _
    %p324 = scmp.le.s32.totalorder 2, %s11
    // Predicated region
    $region45: #{bert4rec_forward.12} parent=5 // pred_check
      %p325 = pneg %p324
    $region46: #{bert4rec_forward.12} parent=5 // pred_check_branch
      %327 = sbr.rel (%p325) target = $region48
    $region47: #{bert4rec_forward.12} parent=5 // pred_region
      %s328 = ssub.s32 %s11, 2
      // Predicated region
      $region49: #{bert4rec_forward.12} parent=47 // pred_check
        %p329 = pneg %p171
      $region50: #{bert4rec_forward.12} parent=47 // pred_check_branch
        %331 = sbr.rel (%p329) target = $region52
      $region51: #{bert4rec_forward.12} parent=47 // pred_region
        %p332 = scmp.lt.s32.totalorder %s22, 1
        %s333 = scalar_select %p332, %s22, 1
        %p334 = scmp.lt.s32.totalorder %s23, 0
        %s335 = scalar_select %p334, %s23, 0
        %s336 = sadd.s32 %s335, %s333
        %s337 = smul.addr %s336, 4
        %s338 = scalar_lea.vmem %s5, %s337
      $region52: #{bert4rec_forward.12} parent=47 // pred_fallthru
        _
    $region48: #{bert4rec_forward.12} parent=5 // pred_fallthru
      _
  $region6: #{bert4rec_forward.12} parent=0 // loop_footer
    %s15 = sadd.s32 1, %s11
  $region7: #{bert4rec_forward.12} parent=0 // loop_footer_branch
    %10 = sbr.rel target = $region3
  $region8: #{bert4rec_forward.12} parent=0 // loop_exit
    _

// kernel: bert4rec_forward.13
$region0: #{bert4rec_forward.13}
  #allocation0 [shape = 'u32[]', space=smem, size = 0x4, offset = 0x4, fixed_abs, tag = 'smem constant byte address 0x4 - core index']
  #allocation1 [shape = 'u32[144,128]{1,0:T(1,128)}', space=vmem, size = 0x12000, scoped, tag = 'internal scratch']
  %s0 = inlined_call_operand.vmem [shape: bf16[16,32], index: 0, kind: input, shape index: {}]
  %s1 = inlined_call_operand.vmem [shape: bf16[32,96], index: 1, kind: input, shape index: {}]
  %s2 = inlined_call_operand.vmem [shape: f32[1,96], index: 2, kind: input, shape index: {}]
  %s3 = inlined_call_operand.vmem [shape: bf16[16,96], index: 3, kind: output, shape index: {}]
  %s4 = sld [smem:[#allocation0]]
  $region22: #{bert4rec_forward.13} parent=0
    _
  %s6 = ssub.s32 1, %s4
  %s7 = scalar_select 0, %s6, %s4
  // Predicated region
  $region2: #{bert4rec_forward.13} parent=0 // pred_check
    _
  $region3: #{bert4rec_forward.13} parent=0 // pred_check_branch
    %9 = sbr.rel (0) target = $region5
  $region4: #{bert4rec_forward.13} parent=0 // pred_region
    _
  $region5: #{bert4rec_forward.13} parent=0 // pred_fallthru
    _
  // Predicated region
  $region6: #{bert4rec_forward.13} parent=0 // pred_check
    _
  $region7: #{bert4rec_forward.13} parent=0 // pred_check_branch
    %11 = sbr.rel (0) target = $region9
  $region8: #{bert4rec_forward.13} parent=0 // pred_region
    _
  $region9: #{bert4rec_forward.13} parent=0 // pred_fallthru
    _
  // Predicated region
  $region10: #{bert4rec_forward.13} parent=0 // pred_check
    _
  $region11: #{bert4rec_forward.13} parent=0 // pred_check_branch
    %13 = sbr.rel (0) target = $region13
  $region12: #{bert4rec_forward.13} parent=0 // pred_region
    _
  $region13: #{bert4rec_forward.13} parent=0 // pred_fallthru
    _
  %v15 = vld [vmem:[%s0] sm:$0xf]
  %v16 = vld [vmem:[%s0 + $0x4] sm:$0xf]
  %v17 = vld [vmem:[%s1] sm:$0xf]
  %v18 = vld [vmem:[%s1 + $0x4] sm:$0xf]
  %v19 = vld [vmem:[%s1 + $0x8] sm:$0xf]
  %v20 = vld [vmem:[%s1 + $0xc] sm:$0xf]
  %v21 = vld [vmem:[%s2] sm:$0x1]
  %v23 = vlaneseq
  %v24 = vshrl.u32 %v23, 7
  %v25 = vsub.s32 0, %v24
  %v26 = vrot.slane %v21, %v25
  %v30 = vunpack.c.l.b16 %v15
  %v31 = vunpack.c.l.b16 %v16
  %v32 = vpack.c.b16 %v31, %v30
  %v37 = vunpack.c.l.b16 %v17
  %v38 = vunpack.c.l.b16 %v18
  %v39 = vunpack.c.l.b16 %v19
  %v40 = vunpack.c.l.b16 %v20
  %v41 = vpack.c.b16 %v38, %v37
  %v42 = vpack.c.b16 %v40, %v39
  %vm45 = vcmask 261120
  %v47 = vsel %vm45, %v32, 0
  %49 = vmatprep.subr.bf16.mxu0 0
  %50 = vmatpush1.bf16.msra.mxu0 0
  %51 = vmatprep.subr.bf16.mxu0 0
  %52 = vmatpush1.bf16.msra.mxu0 0
  %53 = vmatprep.subr.bf16.mxu0 0
  %54 = vmatpush1.bf16.msra.mxu0 0
  %55 = vmatprep.subr.bf16.mxu0 0
  %56 = vmatpush1.bf16.msra.mxu0 0
  %57 = vmatprep.subr.bf16.mxu0 0
  %58 = vmatpush1.bf16.msra.mxu0 0
  %59 = vmatprep.subr.bf16.mxu0 0
  %60 = vmatpush1.bf16.msra.mxu0 0
  %61 = vmatprep.subr.bf16.mxu0 0
  %62 = vmatpush1.bf16.msra.mxu0 %v42
  %63 = vmatprep.subr.bf16.mxu0 0
  %64 = vmatpush1.bf16.msra.mxu0 %v41
  %65 = vmatprep.subr.bf16.mxu0 0
  %66 = vmatpush2.bf16.msra.mxu0 0
  %67 = vmatprep.subr.bf16.mxu0 0
  %68 = vmatpush2.bf16.msra.mxu0 0
  %69 = vmatprep.subr.bf16.mxu0 0
  %70 = vmatpush2.bf16.msra.mxu0 0
  %71 = vmatprep.subr.bf16.mxu0 0
  %72 = vmatpush2.bf16.msra.mxu0 0
  %73 = vmatprep.subr.bf16.mxu0 0
  %74 = vmatpush2.bf16.msra.mxu0 0
  %75 = vmatprep.subr.bf16.mxu0 0
  %76 = vmatpush2.bf16.msra.mxu0 0
  %77 = vmatprep.subr.bf16.mxu0 0
  %78 = vmatpush2.bf16.msra.mxu0 0
  %79 = vmatprep.subr.bf16.mxu0 0
  %80 = vmatpush2.bf16.msra.mxu0 0
  %81 = vmatprep.mubr.bf16.mxu0 0
  %82 = vmatmul.mubr.bf16.gmra.mxu0 %v47
  %v83 = vpop.f32.mrf.mxu0
  %v84 = vadd.f32 %v26, %v83
  %v85 = vpop.f32.mrf.mxu0
  %v86 = vpop.f32.mrf.mxu0
  %v87 = vadd.f32 %v26, %v86
  %v88 = vpop.f32.mrf.mxu0
  %89 = vdwg.mxu0
  %v90 = vpack.c.bf16 %v87, %v84
  %v92 = vunpack.c.l.b16 %v90
  %v93 = vunpack.c.h.b16 %v90
  %v94 = vpack.c.b16 %v92, %v92
  %v95 = vpack.c.b16 %v93, %v93
  %vm98 = vcmask 781312
  %99 = vst.msk [vmem:[%s3] sm:$0xf] %vm98, %v94
  %100 = vst.msk [vmem:[%s3 + $0x4] sm:$0xf] %vm98, %v95
  // Predicated region
  $region14: #{bert4rec_forward.13} parent=0 // pred_check
    _
  $region15: #{bert4rec_forward.13} parent=0 // pred_check_branch
    %102 = sbr.rel (0) target = $region17
  $region16: #{bert4rec_forward.13} parent=0 // pred_region
    _
  $region17: #{bert4rec_forward.13} parent=0 // pred_fallthru
    _
  // Predicated region
  $region18: #{bert4rec_forward.13} parent=0 // pred_check
    _
  $region19: #{bert4rec_forward.13} parent=0 // pred_check_branch
    %104 = sbr.rel (0) target = $region21
  $region20: #{bert4rec_forward.13} parent=0 // pred_region
    _
  $region21: #{bert4rec_forward.13} parent=0 // pred_fallthru
    _

// kernel: bert4rec_forward.15
$region0: #{bert4rec_forward.15}
  #allocation0 [shape = 'u32[]', space=smem, size = 0x4, offset = 0x4, fixed_abs, tag = 'smem constant byte address 0x4 - core index']
  #allocation1 [shape = 'u32[144,128]{1,0:T(1,128)}', space=vmem, size = 0x12000, scoped, tag = 'internal scratch']
  %s0 = inlined_call_operand.vmem [shape: bf16[16,32], index: 0, kind: input, shape index: {}]
  %s1 = inlined_call_operand.vmem [shape: bf16[32,32], index: 1, kind: input, shape index: {}]
  %s2 = inlined_call_operand.vmem [shape: f32[1,32], index: 2, kind: input, shape index: {}]
  %s3 = inlined_call_operand.vmem [shape: bf16[16,32], index: 3, kind: input, shape index: {}]
  %s4 = inlined_call_operand.vmem [shape: f32[1,32], index: 4, kind: input, shape index: {}]
  %s5 = inlined_call_operand.vmem [shape: f32[1,32], index: 5, kind: input, shape index: {}]
  %s6 = inlined_call_operand.vmem [shape: bf16[16,32], index: 6, kind: output, shape index: {}]
  %s7 = sld [smem:[#allocation0]]
  $region34: #{bert4rec_forward.15} parent=0
    _
  %s9 = ssub.s32 1, %s7
  %s10 = scalar_select 0, %s9, %s7
  // Predicated region
  $region2: #{bert4rec_forward.15} parent=0 // pred_check
    _
  $region3: #{bert4rec_forward.15} parent=0 // pred_check_branch
    %12 = sbr.rel (0) target = $region5
  $region4: #{bert4rec_forward.15} parent=0 // pred_region
    _
  $region5: #{bert4rec_forward.15} parent=0 // pred_fallthru
    _
  // Predicated region
  $region6: #{bert4rec_forward.15} parent=0 // pred_check
    _
  $region7: #{bert4rec_forward.15} parent=0 // pred_check_branch
    %14 = sbr.rel (0) target = $region9
  $region8: #{bert4rec_forward.15} parent=0 // pred_region
    _
  $region9: #{bert4rec_forward.15} parent=0 // pred_fallthru
    _
  // Predicated region
  $region10: #{bert4rec_forward.15} parent=0 // pred_check
    _
  $region11: #{bert4rec_forward.15} parent=0 // pred_check_branch
    %16 = sbr.rel (0) target = $region13
  $region12: #{bert4rec_forward.15} parent=0 // pred_region
    _
  $region13: #{bert4rec_forward.15} parent=0 // pred_fallthru
    _
  // Predicated region
  $region14: #{bert4rec_forward.15} parent=0 // pred_check
    _
  $region15: #{bert4rec_forward.15} parent=0 // pred_check_branch
    %18 = sbr.rel (0) target = $region17
  $region16: #{bert4rec_forward.15} parent=0 // pred_region
    _
  $region17: #{bert4rec_forward.15} parent=0 // pred_fallthru
    _
  // Predicated region
  $region18: #{bert4rec_forward.15} parent=0 // pred_check
    _
  $region19: #{bert4rec_forward.15} parent=0 // pred_check_branch
    %20 = sbr.rel (0) target = $region21
  $region20: #{bert4rec_forward.15} parent=0 // pred_region
    _
  $region21: #{bert4rec_forward.15} parent=0 // pred_fallthru
    _
  // Predicated region
  $region22: #{bert4rec_forward.15} parent=0 // pred_check
    _
  $region23: #{bert4rec_forward.15} parent=0 // pred_check_branch
    %22 = sbr.rel (0) target = $region25
  $region24: #{bert4rec_forward.15} parent=0 // pred_region
    _
  $region25: #{bert4rec_forward.15} parent=0 // pred_fallthru
    _
  %v24 = vld [vmem:[%s0] sm:$0xf]
  %v25 = vld [vmem:[%s0 + $0x4] sm:$0xf]
  %v26 = vld [vmem:[%s1] sm:$0xf]
  %v27 = vld [vmem:[%s1 + $0x4] sm:$0xf]
  %v28 = vld [vmem:[%s1 + $0x8] sm:$0xf]
  %v29 = vld [vmem:[%s1 + $0xc] sm:$0xf]
  %v30 = vld [vmem:[%s2] sm:$0x1]
  %v32 = vlaneseq
  %v33 = vshrl.u32 %v32, 7
  %v34 = vsub.s32 0, %v33
  %v35 = vrot.slane %v30, %v34
  %v39 = vunpack.c.l.b16 %v24
  %v40 = vunpack.c.l.b16 %v25
  %v41 = vpack.c.b16 %v40, %v39
  %v46 = vunpack.c.l.b16 %v26
  %v47 = vunpack.c.l.b16 %v27
  %v48 = vunpack.c.l.b16 %v28
  %v49 = vunpack.c.l.b16 %v29
  %v50 = vpack.c.b16 %v47, %v46
  %v51 = vpack.c.b16 %v49, %v48
  %vm54 = vcmask 261120
  %v56 = vsel %vm54, %v41, 0
  %58 = vmatprep.subr.bf16.mxu0 0
  %59 = vmatpush1.bf16.msra.mxu0 0
  %60 = vmatprep.subr.bf16.mxu0 0
  %61 = vmatpush1.bf16.msra.mxu0 0
  %62 = vmatprep.subr.bf16.mxu0 0
  %63 = vmatpush1.bf16.msra.mxu0 0
  %64 = vmatprep.subr.bf16.mxu0 0
  %65 = vmatpush1.bf16.msra.mxu0 0
  %66 = vmatprep.subr.bf16.mxu0 0
  %67 = vmatpush1.bf16.msra.mxu0 0
  %68 = vmatprep.subr.bf16.mxu0 0
  %69 = vmatpush1.bf16.msra.mxu0 0
  %70 = vmatprep.subr.bf16.mxu0 0
  %71 = vmatpush1.bf16.msra.mxu0 %v51
  %72 = vmatprep.subr.bf16.mxu0 0
  %73 = vmatpush1.bf16.msra.mxu0 %v50
  %74 = vmatprep.subr.bf16.mxu0 0
  %75 = vmatpush2.bf16.msra.mxu0 0
  %76 = vmatprep.subr.bf16.mxu0 0
  %77 = vmatpush2.bf16.msra.mxu0 0
  %78 = vmatprep.subr.bf16.mxu0 0
  %79 = vmatpush2.bf16.msra.mxu0 0
  %80 = vmatprep.subr.bf16.mxu0 0
  %81 = vmatpush2.bf16.msra.mxu0 0
  %82 = vmatprep.subr.bf16.mxu0 0
  %83 = vmatpush2.bf16.msra.mxu0 0
  %84 = vmatprep.subr.bf16.mxu0 0
  %85 = vmatpush2.bf16.msra.mxu0 0
  %86 = vmatprep.subr.bf16.mxu0 0
  %87 = vmatpush2.bf16.msra.mxu0 0
  %88 = vmatprep.subr.bf16.mxu0 0
  %89 = vmatpush2.bf16.msra.mxu0 0
  %90 = vmatprep.mubr.bf16.mxu0 0
  %91 = vmatmul.mubr.bf16.gmra.mxu0 %v56
  %v92 = vpop.f32.mrf.mxu0
  %v93 = vadd.f32 %v35, %v92
  %v94 = vpop.f32.mrf.mxu0
  %v95 = vpop.f32.mrf.mxu0
  %v96 = vadd.f32 %v35, %v95
  %v97 = vpop.f32.mrf.mxu0
  %98 = vdwg.mxu0
  %v99 = vld [vmem:[%s3] sm:$0xf]
  %v100 = vld [vmem:[%s3 + $0x4] sm:$0xf]
  %v101 = vunpack.c.l.bf16 %v99
  %v102 = vunpack.c.l.bf16 %v100
  %v103 = vadd.f32 %v93, %v101
  %v104 = vadd.f32 %v96, %v102
  %v105 = vsel %vm54, %v103, 0.0
  %106 = vadd.xlane.f32.xlu0 %v105
  %v107 = vpop.xlane.xlu0 %106
  %v108 = vsel %vm54, %v104, 0.0
  %109 = vadd.xlane.f32.xlu0 %v108
  %v110 = vpop.xlane.xlu0 %109
  %v111 = vrcp.pop 32.0
  %v112 = vmul.f32 %v107, %v111
  %v113 = vmul.f32 %v110, %v111
  %v114 = vsub.f32 %v103, %v112
  %v115 = vsub.f32 %v104, %v113
  %v116 = vmul.f32 %v114, %v114
  %v117 = vmul.f32 %v115, %v115
  %v118 = vsel %vm54, %v116, 0.0
  %119 = vadd.xlane.f32.xlu0 %v118
  %v120 = vpop.xlane.xlu0 %119
  %v121 = vsel %vm54, %v117, 0.0
  %122 = vadd.xlane.f32.xlu0 %v121
  %v123 = vpop.xlane.xlu0 %122
  %v124 = vmul.f32 %v120, %v111
  %v125 = vmul.f32 %v123, %v111
  %v126 = vadd.f32 %v124, 1e-12
  %v127 = vadd.f32 %v125, 1e-12
  %v128 = vrsqrt.pop %v126
  %v129 = vrsqrt.pop %v127
  %v130 = vmul.f32 %v114, %v128
  %v131 = vmul.f32 %v115, %v129
  %v132 = vld [vmem:[%s4] sm:$0x1]
  %v134 = vlaneseq
  %v135 = vshrl.u32 %v134, 7
  %v136 = vsub.s32 0, %v135
  %v137 = vrot.slane %v132, %v136
  %v139 = vmul.f32 %v130, %v137
  %v140 = vmul.f32 %v131, %v137
  %v141 = vld [vmem:[%s5] sm:$0x1]
  %v143 = vlaneseq
  %v144 = vshrl.u32 %v143, 7
  %v145 = vsub.s32 0, %v144
  %v146 = vrot.slane %v141, %v145
  %v148 = vadd.f32 %v139, %v146
  %v149 = vadd.f32 %v140, %v146
  %v150 = vpack.c.bf16 %v149, %v148
  %v152 = vunpack.c.l.b16 %v150
  %v153 = vunpack.c.h.b16 %v150
  %v154 = vpack.c.b16 %v152, %v152
  %v155 = vpack.c.b16 %v153, %v153
  %vm158 = vcmask 257024
  %159 = vst.msk [vmem:[%s6] sm:$0xf] %vm158, %v154
  %160 = vst.msk [vmem:[%s6 + $0x4] sm:$0xf] %vm158, %v155
  // Predicated region
  $region26: #{bert4rec_forward.15} parent=0 // pred_check
    _
  $region27: #{bert4rec_forward.15} parent=0 // pred_check_branch
    %162 = sbr.rel (0) target = $region29
  $region28: #{bert4rec_forward.15} parent=0 // pred_region
    _
  $region29: #{bert4rec_forward.15} parent=0 // pred_fallthru
    _
  // Predicated region
  $region30: #{bert4rec_forward.15} parent=0 // pred_check
    _
  $region31: #{bert4rec_forward.15} parent=0 // pred_check_branch
    %164 = sbr.rel (0) target = $region33
  $region32: #{bert4rec_forward.15} parent=0 // pred_region
    _
  $region33: #{bert4rec_forward.15} parent=0 // pred_fallthru
    _

// kernel: bert4rec_forward.14
$region0: #{bert4rec_forward.14}
  #allocation0 [shape = 'u32[]', space=smem, size = 0x4, offset = 0x4, fixed_abs, tag = 'smem constant byte address 0x4 - core index']
  #allocation1 [shape = 'u32[144,128]{1,0:T(1,128)}', space=vmem, size = 0x12000, scoped, tag = 'internal scratch']
  %s0 = inlined_call_operand.vmem [shape: bf16[2,8,96], index: 0, kind: input, shape index: {}]
  %s1 = inlined_call_operand.vmem [shape: f32[2,1,8], index: 1, kind: input, shape index: {}]
  %s2 = inlined_call_operand.vmem [shape: bf16[2,8,32], index: 2, kind: output, shape index: {}]
  %s3 = sld [smem:[#allocation0]]
  $region41: #{bert4rec_forward.14} parent=0
    _
  %s5 = ssub.s32 1, %s3
  %s6 = scalar_select 0, %s5, %s3
  loop: start=0, step=1, limit=4
  $region2: #{bert4rec_forward.14} parent=0 // loop_pre_header
    _
  $region3: #{bert4rec_forward.14} parent=0 // loop_header
    %s8 = sphi 0, %s12
    %p9 = scmp.ge.s32.totalorder %s8, 4
    %s18 = sphi 0, %s20
    %s21 = sphi 0, %s18
    %s22 = sphi 0, %s21
    %s38 = sphi 0, %s22
    %s44 = sphi 0, %s46
    %s47 = sphi 0, %s44
    %s48 = sphi 0, %s47
    %s64 = sphi 0, %s48
    %s70 = sphi 0, %s72
    %s73 = sphi 0, %s70
    %s74 = sphi 0, %s73
    %s90 = sphi 0, %s74
  $region4: #{bert4rec_forward.14} parent=0 // loop_header_branch
    %11 = sbr.rel (%p9) target = $region8
  $region5: #{bert4rec_forward.14} parent=0 // loop_body
    %s13 = ssub.s32 %s8, 1
    %s14 = ssub.s32 %s8, 2
    %s15 = sadd.s32 %s8, 1
    %s16 = ssub.s32 %s8, %s15
    %p17 = scmp.eq.s32.totalorder %s16, 0
    %s19 = sadd.s32 %s18, 1
    %s20 = scalar_select %p17, %s18, %s19
    %p23 = pneg %p17
    %p24 = scmp.eq.s32.totalorder %s8, 1
    %p25 = por %p23, %p24
    %p26 = scmp.ne.s32.totalorder %s18, %s21
    %p27 = scmp.eq.s32.totalorder %s8, 0
    %p28 = por %p26, %p27
    %p29 = scmp.ne.s32.totalorder %s18, %s21
    %p30 = scmp.eq.s32.totalorder %s13, 1
    %p31 = por %p29, %p30
    %p32 = scmp.ne.s32.totalorder %s21, %s22
    %p33 = scmp.eq.s32.totalorder %s13, 0
    %p34 = por %p32, %p33
    %p35 = scmp.ne.s32.totalorder %s21, %s22
    %p36 = scmp.eq.s32.totalorder %s14, 1
    %p37 = por %p35, %p36
    %p39 = scmp.ne.s32.totalorder %s22, %s38
    %p40 = scmp.eq.s32.totalorder %s14, 0
    %p41 = por %p39, %p40
    %s42 = ssub.s32 %s8, %s15
    %p43 = scmp.eq.s32.totalorder %s42, 0
    %s45 = sadd.s32 %s44, 1
    %s46 = scalar_select %p43, %s44, %s45
    %p49 = pneg %p43
    %p50 = scmp.eq.s32.totalorder %s8, 1
    %p51 = por %p49, %p50
    %p52 = scmp.ne.s32.totalorder %s44, %s47
    %p53 = scmp.eq.s32.totalorder %s8, 0
    %p54 = por %p52, %p53
    %p55 = scmp.ne.s32.totalorder %s44, %s47
    %p56 = scmp.eq.s32.totalorder %s13, 1
    %p57 = por %p55, %p56
    %p58 = scmp.ne.s32.totalorder %s47, %s48
    %p59 = scmp.eq.s32.totalorder %s13, 0
    %p60 = por %p58, %p59
    %p61 = scmp.ne.s32.totalorder %s47, %s48
    %p62 = scmp.eq.s32.totalorder %s14, 1
    %p63 = por %p61, %p62
    %p65 = scmp.ne.s32.totalorder %s48, %s64
    %p66 = scmp.eq.s32.totalorder %s14, 0
    %p67 = por %p65, %p66
    %s68 = ssub.s32 %s8, %s15
    %p69 = scmp.eq.s32.totalorder %s68, 0
    %s71 = sadd.s32 %s70, 1
    %s72 = scalar_select %p69, %s70, %s71
    %p75 = pneg %p69
    %p76 = scmp.eq.s32.totalorder %s8, 1
    %p77 = por %p75, %p76
    %p78 = scmp.ne.s32.totalorder %s70, %s73
    %p79 = scmp.eq.s32.totalorder %s8, 0
    %p80 = por %p78, %p79
    %p81 = scmp.ne.s32.totalorder %s70, %s73
    %p82 = scmp.eq.s32.totalorder %s13, 1
    %p83 = por %p81, %p82
    %p84 = scmp.ne.s32.totalorder %s73, %s74
    %p85 = scmp.eq.s32.totalorder %s13, 0
    %p86 = por %p84, %p85
    %p87 = scmp.ne.s32.totalorder %s73, %s74
    %p88 = scmp.eq.s32.totalorder %s14, 1
    %p89 = por %p87, %p88
    %p91 = scmp.ne.s32.totalorder %s74, %s90
    %p92 = scmp.eq.s32.totalorder %s14, 0
    %p93 = por %p91, %p92
    %p94 = scmp.le.s32.totalorder 1, %s8
    %p95 = scmp.lt.s32.totalorder %s8, 3
    %p96 = pnand %p94, %p95
    %p97 = pneg %p96
    // Predicated region
    $region9: #{bert4rec_forward.14} parent=5 // pred_check
      _
    $region10: #{bert4rec_forward.14} parent=5 // pred_check_branch
      %99 = sbr.rel (%p96) target = $region12
    $region11: #{bert4rec_forward.14} parent=5 // pred_region
      %s100 = ssub.s32 %s8, 1
    $region12: #{bert4rec_forward.14} parent=5 // pred_fallthru
      _
    %p101 = scmp.lt.s32.totalorder %s8, 2
    // Predicated region
    $region13: #{bert4rec_forward.14} parent=5 // pred_check
      %p102 = pneg %p101
    $region14: #{bert4rec_forward.14} parent=5 // pred_check_branch
      %104 = sbr.rel (%p102) target = $region16
    $region15: #{bert4rec_forward.14} parent=5 // pred_region
      // Predicated region
      $region17: #{bert4rec_forward.14} parent=15 // pred_check
        %p105 = pneg %p28
      $region18: #{bert4rec_forward.14} parent=15 // pred_check_branch
        %107 = sbr.rel (%p105) target = $region20
      $region19: #{bert4rec_forward.14} parent=15 // pred_region
        %p108 = scmp.lt.s32.totalorder %s8, 1
        %s109 = scalar_select %p108, %s8, 1
        %s110 = smul.addr %s109, 4
        %s111 = scalar_lea.vmem %s0, %s110
      $region20: #{bert4rec_forward.14} parent=15 // pred_fallthru
        _
      // Predicated region
      $region21: #{bert4rec_forward.14} parent=15 // pred_check
        %p112 = pneg %p54
      $region22: #{bert4rec_forward.14} parent=15 // pred_check_branch
        %114 = sbr.rel (%p112) target = $region24
      $region23: #{bert4rec_forward.14} parent=15 // pred_region
        %p115 = scmp.lt.s32.totalorder %s8, 1
        %s116 = scalar_select %p115, %s8, 1
        %s117 = scalar_lea.vmem %s1, %s116
      $region24: #{bert4rec_forward.14} parent=15 // pred_fallthru
        _
    $region16: #{bert4rec_forward.14} parent=5 // pred_fallthru
      _
    %p118 = scmp.le.s32.totalorder 1, %s8
    %p119 = scmp.lt.s32.totalorder %s8, 3
    %p120 = pnand %p118, %p119
    %p121 = pneg %p120
    // Predicated region
    $region25: #{bert4rec_forward.14} parent=5 // pred_check
      _
    $region26: #{bert4rec_forward.14} parent=5 // pred_check_branch
      %123 = sbr.rel (%p120) target = $region28
    $region27: #{bert4rec_forward.14} parent=5 // pred_region
      %s124 = ssub.s32 %s8, 1
      %p125 = scmp.lt.s32.totalorder %s13, 1
      %s126 = scalar_select %p125, %s13, 1
      %s127 = smul.addr %s126, 4
      %s128 = scalar_lea.vmem %s0, %s127
      %p129 = pneg %p34
      %p130 = pneg %p31
      %p131 = scmp.lt.s32.totalorder %s13, 1
      %s132 = scalar_select %p131, %s13, 1
      %s133 = scalar_lea.vmem %s1, %s132
      %p134 = pneg %p60
      %p135 = pneg %p57
      %p136 = pneg %p86
      %p137 = pneg %p83
      %p138 = scmp.lt.s32.totalorder %s13, 1
      %s139 = scalar_select %p138, %s13, 1
      %s140 = smul.addr %s139, 4
      %s141 = scalar_lea.vmem %s2, %s140
      %p142 = scmp.lt.s32.totalorder %s13, 1
      %s143 = scalar_select %p142, %s13, 1
      %s144 = smul.addr %s143, 4
      %s145 = scalar_lea.vmem %s0, %s144
      %p146 = scmp.lt.s32.totalorder %s13, 1
      %s147 = scalar_select %p146, %s13, 1
      %s148 = scalar_lea.vmem %s1, %s147
      %p149 = scmp.lt.s32.totalorder %s13, 1
      %s150 = scalar_select %p149, %s13, 1
      %s151 = smul.addr %s150, 4
      %s152 = scalar_lea.vmem %s2, %s151
      %v155 = vld [vmem:[%s148] sm:$0x1]
      %v156 = vsub.f32 1.0, %v155
      %v157 = vmul.f32 %v156, -3.4028235e+38
      %v158 = vld [vmem:[%s145] sm:$0xf]
      %v159 = vmul.bf16 %v158, 1048592000
      %v161 = vlaneseq
      %v162 = vshrl.u32 %v161, 7
      %v163 = vsub.s32 0, %v162
      %v164 = vrot.slane %v157, %v163
      %v167 = vunpack.c.l.b16 %v158
      %v168 = vpack.c.b16 %v167, %v167
      %169 = vrot.lane.b32.xlu0 %v168, 96
      %v170 = vpop.permute.xlu0 %169
      %vm171 = vcmask 130048
      %v173 = vsel %vm171, %v159, 0
      %v176 = vsel %vm171, %v170, 0
      %178 = vmatprep.subr.bf16.mxu0 0
      %179 = vmatpush1.bf16.xpose.msra.mxu0 0
      %180 = vmatprep.subr.bf16.mxu0 0
      %181 = vmatpush1.bf16.xpose.msra.mxu0 0
      %182 = vmatprep.subr.bf16.mxu0 0
      %183 = vmatpush1.bf16.xpose.msra.mxu0 0
      %184 = vmatprep.subr.bf16.mxu0 0
      %185 = vmatpush1.bf16.xpose.msra.mxu0 0
      %186 = vmatprep.subr.bf16.mxu0 0
      %187 = vmatpush1.bf16.xpose.msra.mxu0 0
      %188 = vmatprep.subr.bf16.mxu0 0
      %189 = vmatpush1.bf16.xpose.msra.mxu0 0
      %190 = vmatprep.subr.bf16.mxu0 0
      %191 = vmatpush1.bf16.xpose.msra.mxu0 0
      %192 = vmatprep.subr.bf16.mxu0 0
      %193 = vmatpush1.bf16.xpose.msra.mxu0 %v176
      %194 = vmatprep.subr.bf16.mxu0 0
      %195 = vmatpush2.bf16.xpose.msra.mxu0 0
      %196 = vmatprep.subr.bf16.mxu0 0
      %197 = vmatpush2.bf16.xpose.msra.mxu0 0
      %198 = vmatprep.subr.bf16.mxu0 0
      %199 = vmatpush2.bf16.xpose.msra.mxu0 0
      %200 = vmatprep.subr.bf16.mxu0 0
      %201 = vmatpush2.bf16.xpose.msra.mxu0 0
      %202 = vmatprep.subr.bf16.mxu0 0
      %203 = vmatpush2.bf16.xpose.msra.mxu0 0
      %204 = vmatprep.subr.bf16.mxu0 0
      %205 = vmatpush2.bf16.xpose.msra.mxu0 0
      %206 = vmatprep.subr.bf16.mxu0 0
      %207 = vmatpush2.bf16.xpose.msra.mxu0 0
      %208 = vmatprep.subr.bf16.mxu0 0
      %209 = vmatpush2.bf16.xpose.msra.mxu0 0
      %210 = vmatprep.mubr.bf16.mxu0 0
      %211 = vmatmul.mubr.bf16.gmra.mxu0 %v173
      %v212 = vpop.f32.mrf.mxu0
      %v213 = vadd.f32 %v164, %v212
      %v214 = vpop.f32.mrf.mxu0
      %v215 = vpop.f32.mrf.mxu0
      %v216 = vpop.f32.mrf.mxu0
      %217 = vdwg.mxu0
      %vm218 = vcmask 64512
      %v219 = vsel %vm218, %v213, -inf
      %220 = vmax.xlane.f32.xlu0 %v219
      %v221 = vpop.xlane.xlu0 %220
      %v222 = vsub.f32 %v213, %v221
      %v223 = vmul.f32 %v222, 1.442695
      %v224 = vpow.pop %v223
      %v225 = vsel %vm218, %v224, 0.0
      %226 = vadd.xlane.f32.xlu0 %v225
      %v227 = vpop.xlane.xlu0 %226
      %v228 = vrcp.pop %v227
      %v229 = vpack.c.bf16 %v224, %v224
      %230 = vrot.lane.b32.xlu0 %v168, 64
      %v231 = vpop.permute.xlu0 %230
      %v233 = vsel %vm218, %v229, 0
      %vm235 = vcmask 1043456
      %v237 = vsel %vm235, %v231, 0
      %239 = vmatprep.subr.bf16.mxu0 0
      %240 = vmatpush1.bf16.msra.mxu0 0
      %241 = vmatprep.subr.bf16.mxu0 0
      %242 = vmatpush1.bf16.msra.mxu0 0
      %243 = vmatprep.subr.bf16.mxu0 0
      %244 = vmatpush1.bf16.msra.mxu0 0
      %245 = vmatprep.subr.bf16.mxu0 0
      %246 = vmatpush1.bf16.msra.mxu0 0
      %247 = vmatprep.subr.bf16.mxu0 0
      %248 = vmatpush1.bf16.msra.mxu0 0
      %249 = vmatprep.subr.bf16.mxu0 0
      %250 = vmatpush1.bf16.msra.mxu0 0
      %251 = vmatprep.subr.bf16.mxu0 0
      %252 = vmatpush1.bf16.msra.mxu0 0
      %253 = vmatprep.subr.bf16.mxu0 0
      %254 = vmatpush1.bf16.msra.mxu0 %v237
      %255 = vmatprep.subr.bf16.mxu0 0
      %256 = vmatpush2.bf16.msra.mxu0 0
      %257 = vmatprep.subr.bf16.mxu0 0
      %258 = vmatpush2.bf16.msra.mxu0 0
      %259 = vmatprep.subr.bf16.mxu0 0
      %260 = vmatpush2.bf16.msra.mxu0 0
      %261 = vmatprep.subr.bf16.mxu0 0
      %262 = vmatpush2.bf16.msra.mxu0 0
      %263 = vmatprep.subr.bf16.mxu0 0
      %264 = vmatpush2.bf16.msra.mxu0 0
      %265 = vmatprep.subr.bf16.mxu0 0
      %266 = vmatpush2.bf16.msra.mxu0 0
      %267 = vmatprep.subr.bf16.mxu0 0
      %268 = vmatpush2.bf16.msra.mxu0 0
      %269 = vmatprep.subr.bf16.mxu0 0
      %270 = vmatpush2.bf16.msra.mxu0 0
      %271 = vmatprep.mubr.bf16.mxu0 0
      %272 = vmatmul.mubr.bf16.gmra.mxu0 %v233
      %v273 = vpop.f32.mrf.mxu0
      %v274 = vadd.f32 0.0, %v273
      %v275 = vpop.f32.mrf.mxu0
      %v276 = vpop.f32.mrf.mxu0
      %v277 = vpop.f32.mrf.mxu0
      %278 = vdwg.mxu0
      %v279 = vmul.f32 %v274, %v228
      %v280 = vpack.c.bf16 %v279, %v279
      %vm281 = vcmask 125952
      %282 = vst.msk [vmem:[%s152] sm:$0xf] %vm281, %v280
      %v283 = vld [vmem:[%s145] sm:$0xf]
      %v284 = vmul.bf16 %v283, 1048592000
      %v286 = vunpack.c.l.b16 %v284
      %v287 = vpack.c.b16 %v286, %v286
      %288 = vrot.lane.b32.xlu0 %v287, 112
      %v289 = vpop.permute.xlu0 %288
      %v291 = vunpack.c.l.b16 %v283
      %v292 = vpack.c.b16 %v291, %v291
      %293 = vrot.lane.b32.xlu0 %v292, 80
      %v294 = vpop.permute.xlu0 %293
      %v296 = vsel %vm171, %v289, 0
      %v299 = vsel %vm171, %v294, 0
      %301 = vmatprep.subr.bf16.mxu0 0
      %302 = vmatpush1.bf16.xpose.msra.mxu0 0
      %303 = vmatprep.subr.bf16.mxu0 0
      %304 = vmatpush1.bf16.xpose.msra.mxu0 0
      %305 = vmatprep.subr.bf16.mxu0 0
      %306 = vmatpush1.bf16.xpose.msra.mxu0 0
      %307 = vmatprep.subr.bf16.mxu0 0
      %308 = vmatpush1.bf16.xpose.msra.mxu0 0
      %309 = vmatprep.subr.bf16.mxu0 0
      %310 = vmatpush1.bf16.xpose.msra.mxu0 0
      %311 = vmatprep.subr.bf16.mxu0 0
      %312 = vmatpush1.bf16.xpose.msra.mxu0 0
      %313 = vmatprep.subr.bf16.mxu0 0
      %314 = vmatpush1.bf16.xpose.msra.mxu0 0
      %315 = vmatprep.subr.bf16.mxu0 0
      %316 = vmatpush1.bf16.xpose.msra.mxu0 %v299
      %317 = vmatprep.subr.bf16.mxu0 0
      %318 = vmatpush2.bf16.xpose.msra.mxu0 0
      %319 = vmatprep.subr.bf16.mxu0 0
      %320 = vmatpush2.bf16.xpose.msra.mxu0 0
      %321 = vmatprep.subr.bf16.mxu0 0
      %322 = vmatpush2.bf16.xpose.msra.mxu0 0
      %323 = vmatprep.subr.bf16.mxu0 0
      %324 = vmatpush2.bf16.xpose.msra.mxu0 0
      %325 = vmatprep.subr.bf16.mxu0 0
      %326 = vmatpush2.bf16.xpose.msra.mxu0 0
      %327 = vmatprep.subr.bf16.mxu0 0
      %328 = vmatpush2.bf16.xpose.msra.mxu0 0
      %329 = vmatprep.subr.bf16.mxu0 0
      %330 = vmatpush2.bf16.xpose.msra.mxu0 0
      %331 = vmatprep.subr.bf16.mxu0 0
      %332 = vmatpush2.bf16.xpose.msra.mxu0 0
      %333 = vmatprep.mubr.bf16.mxu0 0
      %334 = vmatmul.mubr.bf16.gmra.mxu0 %v296
      %v335 = vpop.f32.mrf.mxu0
      %v336 = vadd.f32 %v164, %v335
      %v337 = vpop.f32.mrf.mxu0
      %v338 = vpop.f32.mrf.mxu0
      %v339 = vpop.f32.mrf.mxu0
      %340 = vdwg.mxu0
      %v341 = vsel %vm218, %v336, -inf
      %342 = vmax.xlane.f32.xlu0 %v341
      %v343 = vpop.xlane.xlu0 %342
      %v344 = vsub.f32 %v336, %v343
      %v345 = vmul.f32 %v344, 1.442695
      %v346 = vpow.pop %v345
      %v347 = vsel %vm218, %v346, 0.0
      %348 = vadd.xlane.f32.xlu0 %v347
      %v349 = vpop.xlane.xlu0 %348
      %v350 = vrcp.pop %v349
      %v351 = vpack.c.bf16 %v346, %v346
      %352 = vrot.lane.b32.xlu0 %v292, 48
      %v353 = vpop.permute.xlu0 %352
      %v355 = vsel %vm218, %v351, 0
      %v358 = vsel %vm235, %v353, 0
      %360 = vmatprep.subr.bf16.mxu0 0
      %361 = vmatpush1.bf16.msra.mxu0 0
      %362 = vmatprep.subr.bf16.mxu0 0
      %363 = vmatpush1.bf16.msra.mxu0 0
      %364 = vmatprep.subr.bf16.mxu0 0
      %365 = vmatpush1.bf16.msra.mxu0 0
      %366 = vmatprep.subr.bf16.mxu0 0
      %367 = vmatpush1.bf16.msra.mxu0 0
      %368 = vmatprep.subr.bf16.mxu0 0
      %369 = vmatpush1.bf16.msra.mxu0 0
      %370 = vmatprep.subr.bf16.mxu0 0
      %371 = vmatpush1.bf16.msra.mxu0 0
      %372 = vmatprep.subr.bf16.mxu0 0
      %373 = vmatpush1.bf16.msra.mxu0 0
      %374 = vmatprep.subr.bf16.mxu0 0
      %375 = vmatpush1.bf16.msra.mxu0 %v358
      %376 = vmatprep.subr.bf16.mxu0 0
      %377 = vmatpush2.bf16.msra.mxu0 0
      %378 = vmatprep.subr.bf16.mxu0 0
      %379 = vmatpush2.bf16.msra.mxu0 0
      %380 = vmatprep.subr.bf16.mxu0 0
      %381 = vmatpush2.bf16.msra.mxu0 0
      %382 = vmatprep.subr.bf16.mxu0 0
      %383 = vmatpush2.bf16.msra.mxu0 0
      %384 = vmatprep.subr.bf16.mxu0 0
      %385 = vmatpush2.bf16.msra.mxu0 0
      %386 = vmatprep.subr.bf16.mxu0 0
      %387 = vmatpush2.bf16.msra.mxu0 0
      %388 = vmatprep.subr.bf16.mxu0 0
      %389 = vmatpush2.bf16.msra.mxu0 0
      %390 = vmatprep.subr.bf16.mxu0 0
      %391 = vmatpush2.bf16.msra.mxu0 0
      %392 = vmatprep.mubr.bf16.mxu0 0
      %393 = vmatmul.mubr.bf16.gmra.mxu0 %v355
      %v394 = vpop.f32.mrf.mxu0
      %v395 = vadd.f32 0.0, %v394
      %v396 = vpop.f32.mrf.mxu0
      %v397 = vpop.f32.mrf.mxu0
      %v398 = vpop.f32.mrf.mxu0
      %399 = vdwg.mxu0
      %v400 = vmul.f32 %v395, %v350
      %v401 = vpack.c.bf16 %v400, %v400
      %v403 = vunpack.c.l.b16 %v401
      %v404 = vpack.c.b16 %v403, %v403
      %405 = vrot.lane.b32.xlu0 %v404, 16
      %v406 = vpop.permute.xlu0 %405
      %vm408 = vcmask 257152
      %409 = vst.msk [vmem:[%s152] sm:$0xf] %vm408, %v406
      %p410 = scmp.lt.s32.totalorder %s13, 1
      %s411 = scalar_select %p410, %s13, 1
      %s412 = smul.addr %s411, 4
      %s413 = scalar_lea.vmem %s2, %s412
      // Predicated region
      $region29: #{bert4rec_forward.14} parent=27 // pred_check
        %p414 = pneg %p83
      $region30: #{bert4rec_forward.14} parent=27 // pred_check_branch
        %416 = sbr.rel (%p414) target = $region32
      $region31: #{bert4rec_forward.14} parent=27 // pred_region
        _
      $region32: #{bert4rec_forward.14} parent=27 // pred_fallthru
        _
    $region28: #{bert4rec_forward.14} parent=5 // pred_fallthru
      _
    %p417 = scmp.le.s32.totalorder 2, %s8
    // Predicated region
    $region33: #{bert4rec_forward.14} parent=5 // pred_check
      %p418 = pneg %p417
    $region34: #{bert4rec_forward.14} parent=5 // pred_check_branch
      %420 = sbr.rel (%p418) target = $region36
    $region35: #{bert4rec_forward.14} parent=5 // pred_region
      %s421 = ssub.s32 %s8, 2
      // Predicated region
      $region37: #{bert4rec_forward.14} parent=35 // pred_check
        %p422 = pneg %p89
      $region38: #{bert4rec_forward.14} parent=35 // pred_check_branch
        %424 = sbr.rel (%p422) target = $region40
      $region39: #{bert4rec_forward.14} parent=35 // pred_region
        %p425 = scmp.lt.s32.totalorder %s14, 1
        %s426 = scalar_select %p425, %s14, 1
        %s427 = smul.addr %s426, 4
        %s428 = scalar_lea.vmem %s2, %s427
      $region40: #{bert4rec_forward.14} parent=35 // pred_fallthru
        _
    $region36: #{bert4rec_forward.14} parent=5 // pred_fallthru
      _
  $region6: #{bert4rec_forward.14} parent=0 // loop_footer
    %s12 = sadd.s32 1, %s8
  $region7: #{bert4rec_forward.14} parent=0 // loop_footer_branch
    %7 = sbr.rel target = $region3
  $region8: #{bert4rec_forward.14} parent=0 // loop_exit
    _

// kernel: bert4rec_forward.16
$region0: #{bert4rec_forward.16}
  #allocation0 [shape = 'u32[]', space=smem, size = 0x4, offset = 0x4, fixed_abs, tag = 'smem constant byte address 0x4 - core index']
  #allocation1 [shape = 'u32[144,128]{1,0:T(1,128)}', space=vmem, size = 0x12000, scoped, tag = 'internal scratch']
  %s0 = inlined_call_operand.vmem [shape: bf16[16,32], index: 0, kind: input, shape index: {}]
  %s1 = inlined_call_operand.vmem [shape: bf16[32,64], index: 1, kind: input, shape index: {}]
  %s2 = inlined_call_operand.vmem [shape: f32[1,64], index: 2, kind: input, shape index: {}]
  %s3 = inlined_call_operand.vmem [shape: bf16[16,64], index: 3, kind: output, shape index: {}]
  %s4 = sld [smem:[#allocation0]]
  $region22: #{bert4rec_forward.16} parent=0
    _
  %s6 = ssub.s32 1, %s4
  %s7 = scalar_select 0, %s6, %s4
  // Predicated region
  $region2: #{bert4rec_forward.16} parent=0 // pred_check
    _
  $region3: #{bert4rec_forward.16} parent=0 // pred_check_branch
    %9 = sbr.rel (0) target = $region5
  $region4: #{bert4rec_forward.16} parent=0 // pred_region
    _
  $region5: #{bert4rec_forward.16} parent=0 // pred_fallthru
    _
  // Predicated region
  $region6: #{bert4rec_forward.16} parent=0 // pred_check
    _
  $region7: #{bert4rec_forward.16} parent=0 // pred_check_branch
    %11 = sbr.rel (0) target = $region9
  $region8: #{bert4rec_forward.16} parent=0 // pred_region
    _
  $region9: #{bert4rec_forward.16} parent=0 // pred_fallthru
    _
  // Predicated region
  $region10: #{bert4rec_forward.16} parent=0 // pred_check
    _
  $region11: #{bert4rec_forward.16} parent=0 // pred_check_branch
    %13 = sbr.rel (0) target = $region13
  $region12: #{bert4rec_forward.16} parent=0 // pred_region
    _
  $region13: #{bert4rec_forward.16} parent=0 // pred_fallthru
    _
  %v15 = vld [vmem:[%s0] sm:$0xf]
  %v16 = vld [vmem:[%s0 + $0x4] sm:$0xf]
  %v17 = vld [vmem:[%s1] sm:$0xf]
  %v18 = vld [vmem:[%s1 + $0x4] sm:$0xf]
  %v19 = vld [vmem:[%s1 + $0x8] sm:$0xf]
  %v20 = vld [vmem:[%s1 + $0xc] sm:$0xf]
  %v21 = vld [vmem:[%s2] sm:$0x1]
  %v23 = vlaneseq
  %v24 = vshrl.u32 %v23, 7
  %v25 = vsub.s32 0, %v24
  %v26 = vrot.slane %v21, %v25
  %v30 = vunpack.c.l.b16 %v15
  %v31 = vunpack.c.l.b16 %v16
  %v32 = vpack.c.b16 %v31, %v30
  %v37 = vunpack.c.l.b16 %v17
  %v38 = vunpack.c.l.b16 %v18
  %v39 = vunpack.c.l.b16 %v19
  %v40 = vunpack.c.l.b16 %v20
  %v41 = vpack.c.b16 %v38, %v37
  %v42 = vpack.c.b16 %v40, %v39
  %vm45 = vcmask 261120
  %v47 = vsel %vm45, %v32, 0
  %49 = vmatprep.subr.bf16.mxu0 0
  %50 = vmatpush1.bf16.msra.mxu0 0
  %51 = vmatprep.subr.bf16.mxu0 0
  %52 = vmatpush1.bf16.msra.mxu0 0
  %53 = vmatprep.subr.bf16.mxu0 0
  %54 = vmatpush1.bf16.msra.mxu0 0
  %55 = vmatprep.subr.bf16.mxu0 0
  %56 = vmatpush1.bf16.msra.mxu0 0
  %57 = vmatprep.subr.bf16.mxu0 0
  %58 = vmatpush1.bf16.msra.mxu0 0
  %59 = vmatprep.subr.bf16.mxu0 0
  %60 = vmatpush1.bf16.msra.mxu0 0
  %61 = vmatprep.subr.bf16.mxu0 0
  %62 = vmatpush1.bf16.msra.mxu0 %v42
  %63 = vmatprep.subr.bf16.mxu0 0
  %64 = vmatpush1.bf16.msra.mxu0 %v41
  %65 = vmatprep.subr.bf16.mxu0 0
  %66 = vmatpush2.bf16.msra.mxu0 0
  %67 = vmatprep.subr.bf16.mxu0 0
  %68 = vmatpush2.bf16.msra.mxu0 0
  %69 = vmatprep.subr.bf16.mxu0 0
  %70 = vmatpush2.bf16.msra.mxu0 0
  %71 = vmatprep.subr.bf16.mxu0 0
  %72 = vmatpush2.bf16.msra.mxu0 0
  %73 = vmatprep.subr.bf16.mxu0 0
  %74 = vmatpush2.bf16.msra.mxu0 0
  %75 = vmatprep.subr.bf16.mxu0 0
  %76 = vmatpush2.bf16.msra.mxu0 0
  %77 = vmatprep.subr.bf16.mxu0 0
  %78 = vmatpush2.bf16.msra.mxu0 0
  %79 = vmatprep.subr.bf16.mxu0 0
  %80 = vmatpush2.bf16.msra.mxu0 0
  %81 = vmatprep.mubr.bf16.mxu0 0
  %82 = vmatmul.mubr.bf16.gmra.mxu0 %v47
  %v83 = vpop.f32.mrf.mxu0
  %v84 = vadd.f32 %v26, %v83
  %v85 = vpop.f32.mrf.mxu0
  %v86 = vpop.f32.mrf.mxu0
  %v87 = vadd.f32 %v26, %v86
  %v88 = vpop.f32.mrf.mxu0
  %89 = vdwg.mxu0
  %v90 = vmul.f32 %v84, 0.5
  %v91 = vmul.f32 %v87, 0.5
  %v92 = vmul.f32 %v84, 0.044715
  %v93 = vmul.f32 %v87, 0.044715
  %v94 = vmul.f32 %v92, %v84
  %v95 = vmul.f32 %v93, %v87
  %v96 = vmul.f32 %v94, %v84
  %v97 = vmul.f32 %v95, %v87
  %v98 = vadd.f32 %v84, %v96
  %v99 = vadd.f32 %v87, %v97
  %v100 = vmul.f32 %v98, 0.7978846
  %v101 = vmul.f32 %v99, 0.7978846
  %v102 = vtanh.pop %v100
  %v103 = vtanh.pop %v101
  %v104 = vadd.f32 %v102, 1.0
  %v105 = vadd.f32 %v103, 1.0
  %v106 = vmul.f32 %v90, %v104
  %v107 = vmul.f32 %v91, %v105
  %v108 = vpack.c.bf16 %v107, %v106
  %v110 = vunpack.c.l.b16 %v108
  %v111 = vunpack.c.h.b16 %v108
  %v112 = vpack.c.b16 %v110, %v110
  %v113 = vpack.c.b16 %v111, %v111
  %vm116 = vcmask 519168
  %117 = vst.msk [vmem:[%s3] sm:$0xf] %vm116, %v112
  %118 = vst.msk [vmem:[%s3 + $0x4] sm:$0xf] %vm116, %v113
  // Predicated region
  $region14: #{bert4rec_forward.16} parent=0 // pred_check
    _
  $region15: #{bert4rec_forward.16} parent=0 // pred_check_branch
    %120 = sbr.rel (0) target = $region17
  $region16: #{bert4rec_forward.16} parent=0 // pred_region
    _
  $region17: #{bert4rec_forward.16} parent=0 // pred_fallthru
    _
  // Predicated region
  $region18: #{bert4rec_forward.16} parent=0 // pred_check
    _
  $region19: #{bert4rec_forward.16} parent=0 // pred_check_branch
    %122 = sbr.rel (0) target = $region21
  $region20: #{bert4rec_forward.16} parent=0 // pred_region
    _
  $region21: #{bert4rec_forward.16} parent=0 // pred_fallthru
    _

// kernel: bert4rec_forward.23
$region0: #{bert4rec_forward.23}
  #allocation0 [shape = 'u32[]', space=smem, size = 0x4, offset = 0x4, fixed_abs, tag = 'smem constant byte address 0x4 - core index']
  #allocation1 [shape = 'u32[144,128]{1,0:T(1,128)}', space=vmem, size = 0x12000, scoped, tag = 'internal scratch']
  %s0 = inlined_call_operand.vmem [shape: bf16[16,32], index: 0, kind: input, shape index: {}]
  %s1 = inlined_call_operand.vmem [shape: bf16[128,32], index: 1, kind: input, shape index: {}]
  %s2 = inlined_call_operand.vmem [shape: f32[16,128], index: 2, kind: output, shape index: {}]
  %s3 = sld [smem:[#allocation0]]
  $region18: #{bert4rec_forward.23} parent=0
    _
  %s5 = ssub.s32 1, %s3
  %s6 = scalar_select 0, %s5, %s3
  // Predicated region
  $region2: #{bert4rec_forward.23} parent=0 // pred_check
    _
  $region3: #{bert4rec_forward.23} parent=0 // pred_check_branch
    %8 = sbr.rel (0) target = $region5
  $region4: #{bert4rec_forward.23} parent=0 // pred_region
    _
  $region5: #{bert4rec_forward.23} parent=0 // pred_fallthru
    _
  // Predicated region
  $region6: #{bert4rec_forward.23} parent=0 // pred_check
    _
  $region7: #{bert4rec_forward.23} parent=0 // pred_check_branch
    %10 = sbr.rel (0) target = $region9
  $region8: #{bert4rec_forward.23} parent=0 // pred_region
    _
  $region9: #{bert4rec_forward.23} parent=0 // pred_fallthru
    _
  %v12 = vld [vmem:[%s0] sm:$0xf]
  %v13 = vld [vmem:[%s0 + $0x4] sm:$0xf]
  %v14 = vld [vmem:[%s1] sm:$0xf]
  %v15 = vld [vmem:[%s1 + $0x4] sm:$0xf]
  %v16 = vld [vmem:[%s1 + $0x8] sm:$0xf]
  %v17 = vld [vmem:[%s1 + $0xc] sm:$0xf]
  %v18 = vld [vmem:[%s1 + $0x10] sm:$0xf]
  %v19 = vld [vmem:[%s1 + $0x14] sm:$0xf]
  %v20 = vld [vmem:[%s1 + $0x18] sm:$0xf]
  %v21 = vld [vmem:[%s1 + $0x1c] sm:$0xf]
  %v22 = vld [vmem:[%s1 + $0x20] sm:$0xf]
  %v23 = vld [vmem:[%s1 + $0x24] sm:$0xf]
  %v24 = vld [vmem:[%s1 + $0x28] sm:$0xf]
  %v25 = vld [vmem:[%s1 + $0x2c] sm:$0xf]
  %v26 = vld [vmem:[%s1 + $0x30] sm:$0xf]
  %v27 = vld [vmem:[%s1 + $0x34] sm:$0xf]
  %v28 = vld [vmem:[%s1 + $0x38] sm:$0xf]
  %v29 = vld [vmem:[%s1 + $0x3c] sm:$0xf]
  %v32 = vunpack.c.l.b16 %v12
  %v33 = vunpack.c.l.b16 %v13
  %v34 = vpack.c.b16 %v33, %v32
  %v51 = vunpack.c.l.b16 %v14
  %v52 = vunpack.c.l.b16 %v15
  %v53 = vunpack.c.l.b16 %v16
  %v54 = vunpack.c.l.b16 %v17
  %v55 = vunpack.c.l.b16 %v18
  %v56 = vunpack.c.l.b16 %v19
  %v57 = vunpack.c.l.b16 %v20
  %v58 = vunpack.c.l.b16 %v21
  %v59 = vunpack.c.l.b16 %v22
  %v60 = vunpack.c.l.b16 %v23
  %v61 = vunpack.c.l.b16 %v24
  %v62 = vunpack.c.l.b16 %v25
  %v63 = vunpack.c.l.b16 %v26
  %v64 = vunpack.c.l.b16 %v27
  %v65 = vunpack.c.l.b16 %v28
  %v66 = vunpack.c.l.b16 %v29
  %v67 = vpack.c.b16 %v52, %v51
  %v68 = vpack.c.b16 %v54, %v53
  %v69 = vpack.c.b16 %v56, %v55
  %v70 = vpack.c.b16 %v58, %v57
  %v71 = vpack.c.b16 %v60, %v59
  %v72 = vpack.c.b16 %v62, %v61
  %v73 = vpack.c.b16 %v64, %v63
  %v74 = vpack.c.b16 %v66, %v65
  %vm75 = vcmask 261120
  %v77 = vsel %vm75, %v34, 0
  %v80 = vsel %vm75, %v67, 0
  %v83 = vsel %vm75, %v68, 0
  %v86 = vsel %vm75, %v69, 0
  %v89 = vsel %vm75, %v70, 0
  %v92 = vsel %vm75, %v71, 0
  %v95 = vsel %vm75, %v72, 0
  %v98 = vsel %vm75, %v73, 0
  %v101 = vsel %vm75, %v74, 0
  %103 = vmatprep.subr.bf16.mxu0 0
  %104 = vmatpush1.bf16.xpose.msra.mxu0 %v101
  %105 = vmatprep.subr.bf16.mxu0 0
  %106 = vmatpush1.bf16.xpose.msra.mxu0 %v98
  %107 = vmatprep.subr.bf16.mxu0 0
  %108 = vmatpush1.bf16.xpose.msra.mxu0 %v95
  %109 = vmatprep.subr.bf16.mxu0 0
  %110 = vmatpush1.bf16.xpose.msra.mxu0 %v92
  %111 = vmatprep.subr.bf16.mxu0 0
  %112 = vmatpush1.bf16.xpose.msra.mxu0 %v89
  %113 = vmatprep.subr.bf16.mxu0 0
  %114 = vmatpush1.bf16.xpose.msra.mxu0 %v86
  %115 = vmatprep.subr.bf16.mxu0 0
  %116 = vmatpush1.bf16.xpose.msra.mxu0 %v83
  %117 = vmatprep.subr.bf16.mxu0 0
  %118 = vmatpush1.bf16.xpose.msra.mxu0 %v80
  %119 = vmatprep.subr.bf16.mxu0 0
  %120 = vmatpush2.bf16.xpose.msra.mxu0 0
  %121 = vmatprep.subr.bf16.mxu0 0
  %122 = vmatpush2.bf16.xpose.msra.mxu0 0
  %123 = vmatprep.subr.bf16.mxu0 0
  %124 = vmatpush2.bf16.xpose.msra.mxu0 0
  %125 = vmatprep.subr.bf16.mxu0 0
  %126 = vmatpush2.bf16.xpose.msra.mxu0 0
  %127 = vmatprep.subr.bf16.mxu0 0
  %128 = vmatpush2.bf16.xpose.msra.mxu0 0
  %129 = vmatprep.subr.bf16.mxu0 0
  %130 = vmatpush2.bf16.xpose.msra.mxu0 0
  %131 = vmatprep.subr.bf16.mxu0 0
  %132 = vmatpush2.bf16.xpose.msra.mxu0 0
  %133 = vmatprep.subr.bf16.mxu0 0
  %134 = vmatpush2.bf16.xpose.msra.mxu0 0
  %135 = vmatprep.mubr.bf16.mxu0 0
  %136 = vmatmul.mubr.bf16.gmra.mxu0 %v77
  %v137 = vpop.f32.mrf.mxu0
  %v138 = vadd.f32 0.0, %v137
  %v139 = vpop.f32.mrf.mxu0
  %v140 = vpop.f32.mrf.mxu0
  %v141 = vadd.f32 0.0, %v140
  %v142 = vpop.f32.mrf.mxu0
  %143 = vdwg.mxu0
  %144 = vst [vmem:[%s2] sm:$0xff] %v138
  %145 = vst [vmem:[%s2 + $0x8] sm:$0xff] %v141
  // Predicated region
  $region10: #{bert4rec_forward.23} parent=0 // pred_check
    _
  $region11: #{bert4rec_forward.23} parent=0 // pred_check_branch
    %147 = sbr.rel (0) target = $region13
  $region12: #{bert4rec_forward.23} parent=0 // pred_region
    _
  $region13: #{bert4rec_forward.23} parent=0 // pred_fallthru
    _
  // Predicated region
  $region14: #{bert4rec_forward.23} parent=0 // pred_check
    _
  $region15: #{bert4rec_forward.23} parent=0 // pred_check_branch
    %149 = sbr.rel (0) target = $region17
  $region16: #{bert4rec_forward.23} parent=0 // pred_region
    _
  $region17: #{bert4rec_forward.23} parent=0 // pred_fallthru
    _

// kernel: bert4rec_forward.17
$region0: #{bert4rec_forward.17}
  #allocation0 [shape = 'u32[]', space=smem, size = 0x4, offset = 0x4, fixed_abs, tag = 'smem constant byte address 0x4 - core index']
  #allocation1 [shape = 'u32[144,128]{1,0:T(1,128)}', space=vmem, size = 0x12000, scoped, tag = 'internal scratch']
  %s0 = inlined_call_operand.vmem [shape: bf16[16,64], index: 0, kind: input, shape index: {}]
  %s1 = inlined_call_operand.vmem [shape: bf16[64,32], index: 1, kind: input, shape index: {}]
  %s2 = inlined_call_operand.vmem [shape: f32[1,32], index: 2, kind: input, shape index: {}]
  %s3 = inlined_call_operand.vmem [shape: bf16[16,32], index: 3, kind: input, shape index: {}]
  %s4 = inlined_call_operand.vmem [shape: f32[1,32], index: 4, kind: input, shape index: {}]
  %s5 = inlined_call_operand.vmem [shape: f32[1,32], index: 5, kind: input, shape index: {}]
  %s6 = inlined_call_operand.vmem [shape: bf16[16,32], index: 6, kind: output, shape index: {}]
  %s7 = sld [smem:[#allocation0]]
  $region34: #{bert4rec_forward.17} parent=0
    _
  %s9 = ssub.s32 1, %s7
  %s10 = scalar_select 0, %s9, %s7
  // Predicated region
  $region2: #{bert4rec_forward.17} parent=0 // pred_check
    _
  $region3: #{bert4rec_forward.17} parent=0 // pred_check_branch
    %12 = sbr.rel (0) target = $region5
  $region4: #{bert4rec_forward.17} parent=0 // pred_region
    _
  $region5: #{bert4rec_forward.17} parent=0 // pred_fallthru
    _
  // Predicated region
  $region6: #{bert4rec_forward.17} parent=0 // pred_check
    _
  $region7: #{bert4rec_forward.17} parent=0 // pred_check_branch
    %14 = sbr.rel (0) target = $region9
  $region8: #{bert4rec_forward.17} parent=0 // pred_region
    _
  $region9: #{bert4rec_forward.17} parent=0 // pred_fallthru
    _
  // Predicated region
  $region10: #{bert4rec_forward.17} parent=0 // pred_check
    _
  $region11: #{bert4rec_forward.17} parent=0 // pred_check_branch
    %16 = sbr.rel (0) target = $region13
  $region12: #{bert4rec_forward.17} parent=0 // pred_region
    _
  $region13: #{bert4rec_forward.17} parent=0 // pred_fallthru
    _
  // Predicated region
  $region14: #{bert4rec_forward.17} parent=0 // pred_check
    _
  $region15: #{bert4rec_forward.17} parent=0 // pred_check_branch
    %18 = sbr.rel (0) target = $region17
  $region16: #{bert4rec_forward.17} parent=0 // pred_region
    _
  $region17: #{bert4rec_forward.17} parent=0 // pred_fallthru
    _
  // Predicated region
  $region18: #{bert4rec_forward.17} parent=0 // pred_check
    _
  $region19: #{bert4rec_forward.17} parent=0 // pred_check_branch
    %20 = sbr.rel (0) target = $region21
  $region20: #{bert4rec_forward.17} parent=0 // pred_region
    _
  $region21: #{bert4rec_forward.17} parent=0 // pred_fallthru
    _
  // Predicated region
  $region22: #{bert4rec_forward.17} parent=0 // pred_check
    _
  $region23: #{bert4rec_forward.17} parent=0 // pred_check_branch
    %22 = sbr.rel (0) target = $region25
  $region24: #{bert4rec_forward.17} parent=0 // pred_region
    _
  $region25: #{bert4rec_forward.17} parent=0 // pred_fallthru
    _
  %v24 = vld [vmem:[%s0] sm:$0xf]
  %v25 = vld [vmem:[%s0 + $0x4] sm:$0xf]
  %v26 = vld [vmem:[%s1] sm:$0xf]
  %v27 = vld [vmem:[%s1 + $0x4] sm:$0xf]
  %v28 = vld [vmem:[%s1 + $0x8] sm:$0xf]
  %v29 = vld [vmem:[%s1 + $0xc] sm:$0xf]
  %v30 = vld [vmem:[%s1 + $0x10] sm:$0xf]
  %v31 = vld [vmem:[%s1 + $0x14] sm:$0xf]
  %v32 = vld [vmem:[%s1 + $0x18] sm:$0xf]
  %v33 = vld [vmem:[%s1 + $0x1c] sm:$0xf]
  %v34 = vld [vmem:[%s2] sm:$0x1]
  %v36 = vlaneseq
  %v37 = vshrl.u32 %v36, 7
  %v38 = vsub.s32 0, %v37
  %v39 = vrot.slane %v34, %v38
  %v43 = vunpack.c.l.b16 %v24
  %v44 = vunpack.c.l.b16 %v25
  %v45 = vpack.c.b16 %v44, %v43
  %v54 = vunpack.c.l.b16 %v26
  %v55 = vunpack.c.l.b16 %v27
  %v56 = vunpack.c.l.b16 %v28
  %v57 = vunpack.c.l.b16 %v29
  %v58 = vunpack.c.l.b16 %v30
  %v59 = vunpack.c.l.b16 %v31
  %v60 = vunpack.c.l.b16 %v32
  %v61 = vunpack.c.l.b16 %v33
  %v62 = vpack.c.b16 %v55, %v54
  %v63 = vpack.c.b16 %v57, %v56
  %v64 = vpack.c.b16 %v59, %v58
  %v65 = vpack.c.b16 %v61, %v60
  %vm70 = vcmask 523264
  %v72 = vsel %vm70, %v45, 0
  %74 = vmatprep.subr.bf16.mxu0 0
  %75 = vmatpush1.bf16.msra.mxu0 0
  %76 = vmatprep.subr.bf16.mxu0 0
  %77 = vmatpush1.bf16.msra.mxu0 0
  %78 = vmatprep.subr.bf16.mxu0 0
  %79 = vmatpush1.bf16.msra.mxu0 0
  %80 = vmatprep.subr.bf16.mxu0 0
  %81 = vmatpush1.bf16.msra.mxu0 0
  %82 = vmatprep.subr.bf16.mxu0 0
  %83 = vmatpush1.bf16.msra.mxu0 %v65
  %84 = vmatprep.subr.bf16.mxu0 0
  %85 = vmatpush1.bf16.msra.mxu0 %v64
  %86 = vmatprep.subr.bf16.mxu0 0
  %87 = vmatpush1.bf16.msra.mxu0 %v63
  %88 = vmatprep.subr.bf16.mxu0 0
  %89 = vmatpush1.bf16.msra.mxu0 %v62
  %90 = vmatprep.subr.bf16.mxu0 0
  %91 = vmatpush2.bf16.msra.mxu0 0
  %92 = vmatprep.subr.bf16.mxu0 0
  %93 = vmatpush2.bf16.msra.mxu0 0
  %94 = vmatprep.subr.bf16.mxu0 0
  %95 = vmatpush2.bf16.msra.mxu0 0
  %96 = vmatprep.subr.bf16.mxu0 0
  %97 = vmatpush2.bf16.msra.mxu0 0
  %98 = vmatprep.subr.bf16.mxu0 0
  %99 = vmatpush2.bf16.msra.mxu0 0
  %100 = vmatprep.subr.bf16.mxu0 0
  %101 = vmatpush2.bf16.msra.mxu0 0
  %102 = vmatprep.subr.bf16.mxu0 0
  %103 = vmatpush2.bf16.msra.mxu0 0
  %104 = vmatprep.subr.bf16.mxu0 0
  %105 = vmatpush2.bf16.msra.mxu0 0
  %106 = vmatprep.mubr.bf16.mxu0 0
  %107 = vmatmul.mubr.bf16.gmra.mxu0 %v72
  %v108 = vpop.f32.mrf.mxu0
  %v109 = vadd.f32 %v39, %v108
  %v110 = vpop.f32.mrf.mxu0
  %v111 = vpop.f32.mrf.mxu0
  %v112 = vadd.f32 %v39, %v111
  %v113 = vpop.f32.mrf.mxu0
  %114 = vdwg.mxu0
  %v115 = vld [vmem:[%s3] sm:$0xf]
  %v116 = vld [vmem:[%s3 + $0x4] sm:$0xf]
  %v117 = vunpack.c.l.bf16 %v115
  %v118 = vunpack.c.l.bf16 %v116
  %v119 = vadd.f32 %v109, %v117
  %v120 = vadd.f32 %v112, %v118
  %vm121 = vcmask 261120
  %v122 = vsel %vm121, %v119, 0.0
  %123 = vadd.xlane.f32.xlu0 %v122
  %v124 = vpop.xlane.xlu0 %123
  %v125 = vsel %vm121, %v120, 0.0
  %126 = vadd.xlane.f32.xlu0 %v125
  %v127 = vpop.xlane.xlu0 %126
  %v128 = vrcp.pop 32.0
  %v129 = vmul.f32 %v124, %v128
  %v130 = vmul.f32 %v127, %v128
  %v131 = vsub.f32 %v119, %v129
  %v132 = vsub.f32 %v120, %v130
  %v133 = vmul.f32 %v131, %v131
  %v134 = vmul.f32 %v132, %v132
  %v135 = vsel %vm121, %v133, 0.0
  %136 = vadd.xlane.f32.xlu0 %v135
  %v137 = vpop.xlane.xlu0 %136
  %v138 = vsel %vm121, %v134, 0.0
  %139 = vadd.xlane.f32.xlu0 %v138
  %v140 = vpop.xlane.xlu0 %139
  %v141 = vmul.f32 %v137, %v128
  %v142 = vmul.f32 %v140, %v128
  %v143 = vadd.f32 %v141, 1e-12
  %v144 = vadd.f32 %v142, 1e-12
  %v145 = vrsqrt.pop %v143
  %v146 = vrsqrt.pop %v144
  %v147 = vmul.f32 %v131, %v145
  %v148 = vmul.f32 %v132, %v146
  %v149 = vld [vmem:[%s4] sm:$0x1]
  %v151 = vlaneseq
  %v152 = vshrl.u32 %v151, 7
  %v153 = vsub.s32 0, %v152
  %v154 = vrot.slane %v149, %v153
  %v156 = vmul.f32 %v147, %v154
  %v157 = vmul.f32 %v148, %v154
  %v158 = vld [vmem:[%s5] sm:$0x1]
  %v160 = vlaneseq
  %v161 = vshrl.u32 %v160, 7
  %v162 = vsub.s32 0, %v161
  %v163 = vrot.slane %v158, %v162
  %v165 = vadd.f32 %v156, %v163
  %v166 = vadd.f32 %v157, %v163
  %v167 = vpack.c.bf16 %v166, %v165
  %v169 = vunpack.c.l.b16 %v167
  %v170 = vunpack.c.h.b16 %v167
  %v171 = vpack.c.b16 %v169, %v169
  %v172 = vpack.c.b16 %v170, %v170
  %vm175 = vcmask 257024
  %176 = vst.msk [vmem:[%s6] sm:$0xf] %vm175, %v171
  %177 = vst.msk [vmem:[%s6 + $0x4] sm:$0xf] %vm175, %v172
  // Predicated region
  $region26: #{bert4rec_forward.17} parent=0 // pred_check
    _
  $region27: #{bert4rec_forward.17} parent=0 // pred_check_branch
    %179 = sbr.rel (0) target = $region29
  $region28: #{bert4rec_forward.17} parent=0 // pred_region
    _
  $region29: #{bert4rec_forward.17} parent=0 // pred_fallthru
    _
  // Predicated region
  $region30: #{bert4rec_forward.17} parent=0 // pred_check
    _
  $region31: #{bert4rec_forward.17} parent=0 // pred_check_branch
    %181 = sbr.rel (0) target = $region33
  $region32: #{bert4rec_forward.17} parent=0 // pred_region
    _
  $region33: #{bert4rec_forward.17} parent=0 // pred_fallthru
    _

</llo_original>
